<compile_context>
chip_gen: v6e
topology: v6e:2x2x1
jax: 0.10.0
libtpu: 0.0.40
codegen_flags: <defaults>
</compile_context>

<pallas_src>
import math
import functools

import jax
import jax.numpy as jnp
from jax import lax
from jax.experimental import pallas as pl
from jax.experimental.pallas import tpu as pltpu

_LN_EPS = 1e-5
_ROW_TILE = 512                        # max rows per block (roofline sweet spot)
_VMEM_LIMIT = 64 * 1024 * 1024         # explicit scoped-VMEM limit (all gens)
_FUSE_WEIGHT_BYTES = 16 * 1024 * 1024  # fuse out-proj+FFN if bf16 weights fit


def _cparams(*sem):
    return pltpu.CompilerParams(
        dimension_semantics=sem, vmem_limit_bytes=_VMEM_LIMIT)


def _row_tile(M):
    """Largest sublane-aligned row tile <= _ROW_TILE that divides M, preferring
    >= 2 grid blocks so a 2-TC chip (megacore) can shard the parallel axis."""
    if M % 8 != 0:
        return M                                   # block must equal full dim
    cap = min(_ROW_TILE, M if M <= 8 else M // 2)  # >= 2 blocks when possible
    for t in range(cap - cap % 8, 7, -8):
        if M % t == 0:
            return t
    return M


def _const_spec(shape):
    """Grid-invariant weight/bias block: single-buffered (it is revisited,
    never re-fetched) to halve its VMEM footprint (v7x 64 MiB budget)."""
    try:
        return pl.BlockSpec(shape, lambda i: (0, 0),
                            pipeline_mode=pl.Buffered(1))
    except (TypeError, AttributeError):
        return pl.BlockSpec(shape, lambda i: (0, 0))


# ----------------------------------------------------------------------------
# Dense (nn.Linear): y = x @ W_t + b   (W_t pre-transposed (in,out), bf16)
# ----------------------------------------------------------------------------
def _dense_kernel(x_ref, w_ref, b_ref, o_ref):
    x = x_ref[...].astype(jnp.bfloat16)
    y = jnp.dot(x, w_ref[...], preferred_element_type=jnp.float32) + b_ref[...]
    o_ref[...] = y.astype(o_ref.dtype)


def dense(x, w_t, b, out_dtype=jnp.float32):
    M, In = x.shape
    Out = w_t.shape[1]
    tm = _row_tile(M)
    return pl.pallas_call(
        _dense_kernel,
        out_shape=jax.ShapeDtypeStruct((M, Out), out_dtype),
        grid=(pl.cdiv(M, tm),),
        in_specs=[
            pl.BlockSpec((tm, In), lambda i: (i, 0)),
            _const_spec((In, Out)),
            _const_spec((1, Out)),
        ],
        out_specs=pl.BlockSpec((tm, Out), lambda i: (i, 0)),
        compiler_params=_cparams("parallel"),
    )(x, w_t, b)


# ----------------------------------------------------------------------------
# Attention core: one batch element per grid step.  Input is the packed QKV
# projection (B, S, 3D) in bf16 (1/sqrt(hd) already folded into Q); output is
# the lane-dense per-batch context (B, S, D) in bf16.  Heads are a static
# unrolled Python loop over static lane offsets -- no wrapper transposes, no
# per-head HBM blocks.
# ----------------------------------------------------------------------------
def _attn_kernel(nhead, hd, D, qkv_ref, o_ref):
    qkv = qkv_ref[0]                              # (S, 3D) bf16
    S = qkv.shape[0]

    # Causal mask generated in-kernel once per batch (shared by all heads).
    row = lax.broadcasted_iota(jnp.int32, (S, S), 0)
    col = lax.broadcasted_iota(jnp.int32, (S, S), 1)
    causal = col <= row

    # TODO(synk): for long sequences (S >~ 1k) tile the KV axis flash-style
    # (online softmax + pl.when skip of fully-masked tiles) to bound the
    # O(S^2) f32 score tile; unnecessary at the small S used here.
    ctxs = []
    for h in range(nhead):                        # static unrolled head loop
        lo = h * hd
        q = qkv[:, lo:lo + hd]                    # (S, hd) bf16 (pre-scaled)
        k = qkv[:, D + lo:D + lo + hd]
        v = qkv[:, 2 * D + lo:2 * D + lo + hd]

        # scores = q @ k^T without an explicit transpose
        s = lax.dot_general(q, k, (((1,), (1,)), ((), ())),
                            preferred_element_type=jnp.float32)   # (S, S) f32
        s = jnp.where(causal, s, jnp.float32(-1e30))

        m = jnp.max(s, axis=-1, keepdims=True)
        p = jnp.exp(s - m)
        denom = jnp.sum(p, axis=-1, keepdims=True)

        ctx = jnp.dot(p.astype(jnp.bfloat16), v,
                      preferred_element_type=jnp.float32)          # (S, hd)
        # Normalize AFTER the PV matmul: (S, hd) multiply instead of (S, S).
        ctx = ctx * pl.reciprocal(denom, approx=True)
        ctxs.append(ctx)

    out = ctxs[0] if nhead == 1 else jnp.concatenate(ctxs, axis=-1)  # (S, D)
    o_ref[0] = out.astype(o_ref.dtype)


def attn_core(qkv, nhead):
    B, S, D3 = qkv.shape
    D = D3 // 3
    hd = D // nhead
    kernel = functools.partial(_attn_kernel, nhead, hd, D)
    return pl.pallas_call(
        kernel,
        out_shape=jax.ShapeDtypeStruct((B, S, D), jnp.bfloat16),
        grid=(B,),
        in_specs=[pl.BlockSpec((1, S, D3), lambda b: (b, 0, 0))],
        out_specs=pl.BlockSpec((1, S, D), lambda b: (b, 0, 0)),
        compiler_params=_cparams("parallel"),
    )(qkv)


# ----------------------------------------------------------------------------
# Fused: attention out-proj + residual + LN1 + FFN(relu) + residual + LN2
# (used when the bf16 weight set fits VMEM comfortably; removes the (B*S, D)
# HBM round-trip of `y` per layer)
# ----------------------------------------------------------------------------
def _attn_ffn_kernel(eps, ctx_ref, x_ref, wo_ref, bo_ref, g1w_ref, g1b_ref,
                     w1_ref, b1_ref, w2_ref, b2_ref, g2w_ref, g2b_ref, o_ref):
    attn = (jnp.dot(ctx_ref[...], wo_ref[...],
                    preferred_element_type=jnp.float32) + bo_ref[...])
    y = x_ref[...] + attn
    mu = jnp.mean(y, axis=-1, keepdims=True)
    var = jnp.mean(y * y, axis=-1, keepdims=True) - mu * mu
    y = (y - mu) * lax.rsqrt(var + eps) * g1w_ref[...] + g1b_ref[...]

    h = (jnp.dot(y.astype(jnp.bfloat16), w1_ref[...],
                 preferred_element_type=jnp.float32) + b1_ref[...])
    h = jnp.maximum(h, 0.0)
    h2 = (jnp.dot(h.astype(jnp.bfloat16), w2_ref[...],
                  preferred_element_type=jnp.float32) + b2_ref[...])
    z = y + h2
    mu2 = jnp.mean(z, axis=-1, keepdims=True)
    var2 = jnp.mean(z * z, axis=-1, keepdims=True) - mu2 * mu2
    o_ref[...] = (z - mu2) * lax.rsqrt(var2 + eps) * g2w_ref[...] + g2b_ref[...]


def attn_ffn_fused(ctx, x, p):
    M, D = x.shape
    F = p["w1_t"].shape[1]
    tm = _row_tile(M)
    kernel = functools.partial(_attn_ffn_kernel, _LN_EPS)
    row = lambda i: (i, 0)
    return pl.pallas_call(
        kernel,
        out_shape=jax.ShapeDtypeStruct((M, D), jnp.float32),
        grid=(pl.cdiv(M, tm),),
        in_specs=[
            pl.BlockSpec((tm, D), row),      # ctx (bf16)
            pl.BlockSpec((tm, D), row),      # residual x (f32)
            _const_spec((D, D)),             # wo_t
            _const_spec((1, D)),             # bo
            _const_spec((1, D)),             # ln1 w
            _const_spec((1, D)),             # ln1 b
            _const_spec((D, F)),             # w1_t
            _const_spec((1, F)),             # b1
            _const_spec((F, D)),             # w2_t
            _const_spec((1, D)),             # b2
            _const_spec((1, D)),             # ln2 w
            _const_spec((1, D)),             # ln2 b
        ],
        out_specs=pl.BlockSpec((tm, D), row),
        compiler_params=_cparams("parallel"),
    )(ctx, x, p["wo_t"], p["bo"], p["ln1w"], p["ln1b"],
      p["w1_t"], p["b1"], p["w2_t"], p["b2"], p["ln2w"], p["ln2b"])


# ----------------------------------------------------------------------------
# Split path (kept for large D*F on v7x): out-proj+LN1, then FFN+LN2
# ----------------------------------------------------------------------------
def _attn_out_kernel(eps, ctx_ref, x_ref, wo_ref, bo_ref, gw_ref, gb_ref, o_ref):
    attn = (jnp.dot(ctx_ref[...], wo_ref[...],
                    preferred_element_type=jnp.float32) + bo_ref[...])
    y = x_ref[...] + attn
    mu = jnp.mean(y, axis=-1, keepdims=True)
    var = jnp.mean(y * y, axis=-1, keepdims=True) - mu * mu
    o_ref[...] = ((y - mu) * lax.rsqrt(var + eps) * gw_ref[...]
                  + gb_ref[...]).astype(o_ref.dtype)


def attn_out(ctx, x, wo_t, bo, gw, gb):
    M, D = x.shape
    tm = _row_tile(M)
    kernel = functools.partial(_attn_out_kernel, _LN_EPS)
    row = lambda i: (i, 0)
    return pl.pallas_call(
        kernel,
        out_shape=jax.ShapeDtypeStruct((M, D), jnp.bfloat16),  # bf16 boundary
        grid=(pl.cdiv(M, tm),),
        in_specs=[
            pl.BlockSpec((tm, D), row),
            pl.BlockSpec((tm, D), row),
            _const_spec((D, D)),
            _const_spec((1, D)),
            _const_spec((1, D)),
            _const_spec((1, D)),
        ],
        out_specs=pl.BlockSpec((tm, D), row),
        compiler_params=_cparams("parallel"),
    )(ctx, x, wo_t, bo, gw, gb)


def _ffn_kernel(eps, y_ref, w1_ref, b1_ref, w2_ref, b2_ref, gw_ref, gb_ref, o_ref):
    y_in = y_ref[...]                       # bf16 from attn_out
    y = y_in.astype(jnp.float32)
    h = (jnp.dot(y_in, w1_ref[...], preferred_element_type=jnp.float32)
         + b1_ref[...])
    h = jnp.maximum(h, 0.0)
    h2 = (jnp.dot(h.astype(jnp.bfloat16), w2_ref[...],
                  preferred_element_type=jnp.float32) + b2_ref[...])
    z = y + h2
    mu = jnp.mean(z, axis=-1, keepdims=True)
    var = jnp.mean(z * z, axis=-1, keepdims=True) - mu * mu
    o_ref[...] = (z - mu) * lax.rsqrt(var + eps) * gw_ref[...] + gb_ref[...]


def ffn(y, w1_t, b1, w2_t, b2, gw, gb):
    M, D = y.shape
    F = w1_t.shape[1]
    tm = _row_tile(M)
    kernel = functools.partial(_ffn_kernel, _LN_EPS)
    row = lambda i: (i, 0)
    return pl.pallas_call(
        kernel,
        out_shape=jax.ShapeDtypeStruct((M, D), jnp.float32),
        grid=(pl.cdiv(M, tm),),
        in_specs=[
            pl.BlockSpec((tm, D), row),
            _const_spec((D, F)),
            _const_spec((1, F)),
            _const_spec((F, D)),
            _const_spec((1, D)),
            _const_spec((1, D)),
            _const_spec((1, D)),
        ],
        out_specs=pl.BlockSpec((tm, D), row),
        compiler_params=_cparams("parallel"),
    )(y, w1_t, b1, w2_t, b2, gw, gb)


# ----------------------------------------------------------------------------
# One post-norm TransformerEncoderLayer
# ----------------------------------------------------------------------------
def encoder_layer(x, p, nhead, fuse):
    B, S, D = x.shape
    x_flat = x.reshape(B * S, D)

    # Packed QKV projection in bf16 (Q pre-scaled); no head transpose needed.
    qkv = dense(x_flat, p["wqkv_t"], p["bqkv"], out_dtype=jnp.bfloat16)
    qkv = qkv.reshape(B, S, 3 * D)            # free reshape

    ctx = attn_core(qkv, nhead)               # (B, S, D) bf16, lane-dense
    ctx_flat = ctx.reshape(B * S, D)          # free reshape

    if fuse:
        z = attn_ffn_fused(ctx_flat, x_flat, p)
    else:
        y = attn_out(ctx_flat, x_flat, p["wo_t"], p["bo"], p["ln1w"], p["ln1b"])
        z = ffn(y, p["w1_t"], p["b1"], p["w2_t"], p["b2"], p["ln2w"], p["ln2b"])
    return z.reshape(B, S, D)


# ----------------------------------------------------------------------------
# Full model forward
# ----------------------------------------------------------------------------
def transformer_forward(src, prep, nhead):
    # src: (B, S, input_size)  -> out: (B, S, output_size)
    B, S, In = src.shape
    D = prep["lin1_wt"].shape[1]
    Out = prep["dec_wt"].shape[1]
    F = prep["layers"][0]["w1_t"].shape[1] if prep["layers"] else D

    # src * sqrt(embed_size) is folded into lin1's weight.
    x = dense(src.reshape(B * S, In).astype(jnp.float32),
              prep["lin1_wt"], prep["lin1_b"])
    x = x.reshape(B, S, D)

    # Fuse out-proj+LN1+FFN+LN2 into one kernel when the bf16 weight set fits
    # comfortably in VMEM (keeps v7x's 64 MiB budget safe for large D*F).
    fuse = 2 * (D * D + 2 * D * F) <= _FUSE_WEIGHT_BYTES

    for lp in prep["layers"]:
        x = encoder_layer(x, lp, nhead, fuse)

    out = dense(x.reshape(B * S, D), prep["dec_wt"], prep["dec_b"])
    return out.reshape(B, S, Out)
    # TODO(synk): dropout layers are identity here (eval-mode semantics).


# ----------------------------------------------------------------------------
# Deterministic parameter construction (PyTorch layout) + kernel-layout prep
# ----------------------------------------------------------------------------
def init_params(key, input_size, hidden_size, output_size, nhead, nlayers):
    D, F = hidden_size, hidden_size   # dim_feedforward == hidden_size in module

    def nrm(k, shape, scale=0.05):
        return (scale * jax.random.normal(k, shape)).astype(jnp.float32)

    keys = jax.random.split(key, 4 + nlayers)
    params = {
        "lin1_w": nrm(keys[0], (D, input_size)),
        "lin1_b": nrm(keys[1], (D,)),
        "dec_w": nrm(keys[2], (output_size, D)),
        "dec_b": nrm(keys[3], (output_size,)),
        "layers": [],
    }
    for li in range(nlayers):
        lk = jax.random.split(keys[4 + li], 8)
        params["layers"].append({
            "wqkv": nrm(lk[0], (3 * D, D)),   # PyTorch [Q;K;V]-stacked in_proj
            "bqkv": nrm(lk[1], (3 * D,)),
            "wo": nrm(lk[2], (D, D)),
            "bo": nrm(lk[3], (D,)),
            "ln1w": jnp.ones((D,), jnp.float32),
            "ln1b": jnp.zeros((D,), jnp.float32),
            "w1": nrm(lk[4], (F, D)),
            "b1": nrm(lk[5], (F,)),
            "w2": nrm(lk[6], (D, F)),
            "b2": nrm(lk[7], (D,)),
            "ln2w": jnp.ones((D,), jnp.float32),
            "ln2b": jnp.zeros((D,), jnp.float32),
        })
    return params


def prepare_params(params, nhead):
    """PyTorch-layout f32 params -> kernel layout: weights transposed to
    (in, out) bf16, biases/LN params f32 (1, N), scales folded in."""
    D, In = params["lin1_w"].shape
    hd = D // nhead
    src_scale = math.sqrt(In)          # src * sqrt(embed_size) before lin1
    q_scale = 1.0 / math.sqrt(hd)      # attention score scale

    def b2d(b):
        return b.reshape(1, -1).astype(jnp.float32)

    prep = {
        "lin1_wt": (params["lin1_w"] * src_scale).T.astype(jnp.bfloat16),
        "lin1_b": b2d(params["lin1_b"]),
        "dec_wt": params["dec_w"].T.astype(jnp.bfloat16),
        "dec_b": b2d(params["dec_b"]),
        "layers": [],
    }
    for lp in params["layers"]:
        wqkv = lp["wqkv"].at[:D].multiply(q_scale)   # fold scale into Q rows
        bqkv = lp["bqkv"].at[:D].multiply(q_scale)
        prep["layers"].append({
            "wqkv_t": wqkv.T.astype(jnp.bfloat16),
            "bqkv": b2d(bqkv),
            "wo_t": lp["wo"].T.astype(jnp.bfloat16),
            "bo": b2d(lp["bo"]),
            "ln1w": b2d(lp["ln1w"]),
            "ln1b": b2d(lp["ln1b"]),
            "w1_t": lp["w1"].T.astype(jnp.bfloat16),
            "b1": b2d(lp["b1"]),
            "w2_t": lp["w2"].T.astype(jnp.bfloat16),
            "b2": b2d(lp["b2"]),
            "ln2w": b2d(lp["ln2w"]),
            "ln2b": b2d(lp["ln2b"]),
        })
    return prep


if __name__ == "__main__":
    # Small shapes consistent with the module's forward:
    # src: (batch=2, seq=8, input_size=16); hidden=32, nhead=4, nlayers=2, out=8
    # (NOTE: these toy dims are far below the MXU's native tile; benchmark with
    #  realistic D/S/head_dim for meaningful numbers.)
    batch, seq = 2, 8
    input_size, hidden_size, output_size = 16, 32, 8
    nhead, nlayers = 4, 2

    key = jax.random.PRNGKey(0)
    k_src, k_par = jax.random.split(key)
    src = jax.random.normal(k_src, (batch, seq, input_size), dtype=jnp.float32)

    params = init_params(k_par, input_size, hidden_size, output_size, nhead, nlayers)
    prep = prepare_params(params, nhead)

    fwd = jax.jit(functools.partial(transformer_forward, nhead=nhead))
    out = fwd(src, prep)
    out = jax.block_until_ready(out)

    assert out.shape == (batch, seq, output_size), out.shape
    assert bool(jnp.all(jnp.isfinite(out)))
    print("KERNEL_OK")
</pallas_src>

<mosaic_0001>
module attributes {stable_mosaic.version = 11 : i64} {
  func.func @_dense_kernel(%arg0: i32, %arg1: memref<8x32xf32, #tpu.memory_space<vmem>>, %arg2: memref<32x96xbf16, #tpu.memory_space<vmem>>, %arg3: memref<1x96xf32, #tpu.memory_space<vmem>>, %arg4: memref<8x96xbf16, #tpu.memory_space<vmem>>) attributes {dimension_semantics = [#tpu.dimension_semantics<parallel>], iteration_bounds = array<i64: 2>, scalar_prefetch = 0 : i64, scratch_operands = 0 : i64, tpu.core_type = #tpu.core_type<tc>, window_params = [{transform_indices = @transform_0, window_bounds = array<i64: 8, 32>}, {pipeline_mode = #tpu.pipeline_mode<synchronous>, transform_indices = @transform_1, window_bounds = array<i64: 32, 96>}, {pipeline_mode = #tpu.pipeline_mode<synchronous>, transform_indices = @transform_2, window_bounds = array<i64: 1, 96>}, {transform_indices = @transform_3, window_bounds = array<i64: 8, 96>}]} {
    %c0 = arith.constant 0 : index
    %c0_0 = arith.constant 0 : index
    %0 = vector.load %arg1[%c0, %c0_0] : memref<8x32xf32, #tpu.memory_space<vmem>>, vector<8x32xf32>
    %1 = arith.truncf %0 : vector<8x32xf32> to vector<8x32xbf16>
    %c0_1 = arith.constant 0 : index
    %c0_2 = arith.constant 0 : index
    %2 = vector.load %arg2[%c0_1, %c0_2] : memref<32x96xbf16, #tpu.memory_space<vmem>>, vector<32x96xbf16>
    %cst = arith.constant dense<0.000000e+00> : vector<8x96xf32>
    %3 = tpu.matmul %1, %2, %cst {dimension_numbers = #tpu.dot_dimension_numbers<[1], [0], [0], [1], [0, 0, 1, 1], [], []>} : vector<8x32xbf16>, vector<32x96xbf16>, vector<8x96xf32> -> vector<8x96xf32>
    %c0_3 = arith.constant 0 : index
    %c0_4 = arith.constant 0 : index
    %4 = vector.load %arg3[%c0_3, %c0_4] : memref<1x96xf32, #tpu.memory_space<vmem>>, vector<1x96xf32>
    %5 = vector.broadcast %4 : vector<1x96xf32> to vector<8x96xf32>
    %6 = arith.addf %3, %5 : vector<8x96xf32>
    %7 = arith.truncf %6 : vector<8x96xf32> to vector<8x96xbf16>
    %c0_5 = arith.constant 0 : index
    %c0_6 = arith.constant 0 : index
    %8 = vector.load %arg4[%c0_5, %c0_6] : memref<8x96xbf16, #tpu.memory_space<vmem>>, vector<8x96xbf16>
    tpu.vector_store %arg4[%c0_5, %c0_6], %7 {strides = array<i32>} : memref<8x96xbf16, #tpu.memory_space<vmem>>, vector<8x96xbf16>,
    return
  }
  func.func @transform_0(%arg0: i32) -> (i32, i32) {
    %c0_i32 = arith.constant 0 : i32
    %c0_i32_0 = arith.constant 0 : i32
    return %arg0, %c0_i32 : i32, i32
  }
  func.func @transform_1(%arg0: i32) -> (i32, i32) {
    %c0_i32 = arith.constant 0 : i32
    %c0_i32_0 = arith.constant 0 : i32
    %c0_i32_1 = arith.constant 0 : i32
    return %c0_i32, %c0_i32_0 : i32, i32
  }
  func.func @transform_2(%arg0: i32) -> (i32, i32) {
    %c0_i32 = arith.constant 0 : i32
    %c0_i32_0 = arith.constant 0 : i32
    %c0_i32_1 = arith.constant 0 : i32
    return %c0_i32, %c0_i32_0 : i32, i32
  }
  func.func @transform_3(%arg0: i32) -> (i32, i32) {
    %c0_i32 = arith.constant 0 : i32
    %c0_i32_0 = arith.constant 0 : i32
    return %arg0, %c0_i32 : i32, i32
  }
}

module attributes {stable_mosaic.version = 11 : i64} {
  func.func @_attn_kernel(%arg0: i32, %arg1: memref<1x8x96xbf16, #tpu.memory_space<vmem>>, %arg2: memref<1x8x32xbf16, #tpu.memory_space<vmem>>) attributes {dimension_semantics = [#tpu.dimension_semantics<parallel>], iteration_bounds = array<i64: 2>, scalar_prefetch = 0 : i64, scratch_operands = 0 : i64, tpu.core_type = #tpu.core_type<tc>, window_params = [{transform_indices = @transform_0, window_bounds = array<i64: 1, 8, 96>}, {transform_indices = @transform_1, window_bounds = array<i64: 1, 8, 32>}]} {
    %c0 = arith.constant 0 : index
    %c0_0 = arith.constant 0 : index
    %c0_1 = arith.constant 0 : index
    %0 = vector.load %arg1[%c0, %c0_0, %c0_1] : memref<1x8x96xbf16, #tpu.memory_space<vmem>>, vector<1x8x96xbf16>
    %1 = vector.shape_cast %0 : vector<1x8x96xbf16> to vector<8x96xbf16>
    %2 = tpu.iota {dimensions = array<i32: 0>} : vector<8x8xi32>
    %3 = tpu.iota {dimensions = array<i32: 1>} : vector<8x8xi32>
    %4 = arith.cmpi sle, %3, %2 : vector<8x8xi32>
    %5 = vector.extract_strided_slice %1 {offsets = [0, 0], sizes = [8, 8], strides = [1, 1]} : vector<8x96xbf16> to vector<8x8xbf16>
    %6 = vector.extract_strided_slice %1 {offsets = [0, 32], sizes = [8, 8], strides = [1, 1]} : vector<8x96xbf16> to vector<8x8xbf16>
    %7 = vector.extract_strided_slice %1 {offsets = [0, 64], sizes = [8, 8], strides = [1, 1]} : vector<8x96xbf16> to vector<8x8xbf16>
    %cst = arith.constant dense<0.000000e+00> : vector<8x8xf32>
    %8 = tpu.matmul %5, %6, %cst {dimension_numbers = #tpu.dot_dimension_numbers<[1], [1], [0], [0], [0, 0, 1, 0], [], []>} : vector<8x8xbf16>, vector<8x8xbf16>, vector<8x8xf32> -> vector<8x8xf32>
    %cst_2 = arith.constant -1.000000e+30 : f32
    %9 = vector.broadcast %cst_2 : f32 to vector<8x8xf32>
    %10 = arith.select %4, %8, %9 : vector<8x8xi1>, vector<8x8xf32>
    %cst_3 = arith.constant dense<0xFF800000> : vector<8xf32>
    %11 = vector.multi_reduction <maximumf>, %10, %cst_3 [1] : vector<8x8xf32> to vector<8xf32>
    %12 = vector.shape_cast %11 : vector<8xf32> to vector<8x1xf32>
    %13 = vector.broadcast %12 : vector<8x1xf32> to vector<8x8xf32>
    %14 = arith.subf %10, %13 : vector<8x8xf32>
    %15 = math.exp %14 : vector<8x8xf32>
    %cst_4 = arith.constant dense<0.000000e+00> : vector<8xf32>
    %16 = vector.multi_reduction <add>, %15, %cst_4 [1] : vector<8x8xf32> to vector<8xf32>
    %17 = vector.shape_cast %16 : vector<8xf32> to vector<8x1xf32>
    %18 = arith.truncf %15 : vector<8x8xf32> to vector<8x8xbf16>
    %cst_5 = arith.constant dense<0.000000e+00> : vector<8x8xf32>
    %19 = tpu.matmul %18, %7, %cst_5 {dimension_numbers = #tpu.dot_dimension_numbers<[1], [0], [0], [1], [0, 0, 1, 1], [], []>} : vector<8x8xbf16>, vector<8x8xbf16>, vector<8x8xf32> -> vector<8x8xf32>
    %20 = tpu.reciprocal %17 {approx = true} : vector<8x1xf32> -> vector<8x1xf32>
    %21 = vector.broadcast %20 : vector<8x1xf32> to vector<8x8xf32>
    %22 = arith.mulf %19, %21 : vector<8x8xf32>
    %23 = vector.extract_strided_slice %1 {offsets = [0, 8], sizes = [8, 8], strides = [1, 1]} : vector<8x96xbf16> to vector<8x8xbf16>
    %24 = vector.extract_strided_slice %1 {offsets = [0, 40], sizes = [8, 8], strides = [1, 1]} : vector<8x96xbf16> to vector<8x8xbf16>
    %25 = vector.extract_strided_slice %1 {offsets = [0, 72], sizes = [8, 8], strides = [1, 1]} : vector<8x96xbf16> to vector<8x8xbf16>
    %cst_6 = arith.constant dense<0.000000e+00> : vector<8x8xf32>
    %26 = tpu.matmul %23, %24, %cst_6 {dimension_numbers = #tpu.dot_dimension_numbers<[1], [1], [0], [0], [0, 0, 1, 0], [], []>} : vector<8x8xbf16>, vector<8x8xbf16>, vector<8x8xf32> -> vector<8x8xf32>
    %cst_7 = arith.constant -1.000000e+30 : f32
    %27 = vector.broadcast %cst_7 : f32 to vector<8x8xf32>
    %28 = arith.select %4, %26, %27 : vector<8x8xi1>, vector<8x8xf32>
    %cst_8 = arith.constant dense<0xFF800000> : vector<8xf32>
    %29 = vector.multi_reduction <maximumf>, %28, %cst_8 [1] : vector<8x8xf32> to vector<8xf32>
    %30 = vector.shape_cast %29 : vector<8xf32> to vector<8x1xf32>
    %31 = vector.broadcast %30 : vector<8x1xf32> to vector<8x8xf32>
    %32 = arith.subf %28, %31 : vector<8x8xf32>
    %33 = math.exp %32 : vector<8x8xf32>
    %cst_9 = arith.constant dense<0.000000e+00> : vector<8xf32>
    %34 = vector.multi_reduction <add>, %33, %cst_9 [1] : vector<8x8xf32> to vector<8xf32>
    %35 = vector.shape_cast %34 : vector<8xf32> to vector<8x1xf32>
    %36 = arith.truncf %33 : vector<8x8xf32> to vector<8x8xbf16>
    %cst_10 = arith.constant dense<0.000000e+00> : vector<8x8xf32>
    %37 = tpu.matmul %36, %25, %cst_10 {dimension_numbers = #tpu.dot_dimension_numbers<[1], [0], [0], [1], [0, 0, 1, 1], [], []>} : vector<8x8xbf16>, vector<8x8xbf16>, vector<8x8xf32> -> vector<8x8xf32>
    %38 = tpu.reciprocal %35 {approx = true} : vector<8x1xf32> -> vector<8x1xf32>
    %39 = vector.broadcast %38 : vector<8x1xf32> to vector<8x8xf32>
    %40 = arith.mulf %37, %39 : vector<8x8xf32>
    %41 = vector.extract_strided_slice %1 {offsets = [0, 16], sizes = [8, 8], strides = [1, 1]} : vector<8x96xbf16> to vector<8x8xbf16>
    %42 = vector.extract_strided_slice %1 {offsets = [0, 48], sizes = [8, 8], strides = [1, 1]} : vector<8x96xbf16> to vector<8x8xbf16>
    %43 = vector.extract_strided_slice %1 {offsets = [0, 80], sizes = [8, 8], strides = [1, 1]} : vector<8x96xbf16> to vector<8x8xbf16>
    %cst_11 = arith.constant dense<0.000000e+00> : vector<8x8xf32>
    %44 = tpu.matmul %41, %42, %cst_11 {dimension_numbers = #tpu.dot_dimension_numbers<[1], [1], [0], [0], [0, 0, 1, 0], [], []>} : vector<8x8xbf16>, vector<8x8xbf16>, vector<8x8xf32> -> vector<8x8xf32>
    %cst_12 = arith.constant -1.000000e+30 : f32
    %45 = vector.broadcast %cst_12 : f32 to vector<8x8xf32>
    %46 = arith.select %4, %44, %45 : vector<8x8xi1>, vector<8x8xf32>
    %cst_13 = arith.constant dense<0xFF800000> : vector<8xf32>
    %47 = vector.multi_reduction <maximumf>, %46, %cst_13 [1] : vector<8x8xf32> to vector<8xf32>
    %48 = vector.shape_cast %47 : vector<8xf32> to vector<8x1xf32>
    %49 = vector.broadcast %48 : vector<8x1xf32> to vector<8x8xf32>
    %50 = arith.subf %46, %49 : vector<8x8xf32>
    %51 = math.exp %50 : vector<8x8xf32>
    %cst_14 = arith.constant dense<0.000000e+00> : vector<8xf32>
    %52 = vector.multi_reduction <add>, %51, %cst_14 [1] : vector<8x8xf32> to vector<8xf32>
    %53 = vector.shape_cast %52 : vector<8xf32> to vector<8x1xf32>
    %54 = arith.truncf %51 : vector<8x8xf32> to vector<8x8xbf16>
    %cst_15 = arith.constant dense<0.000000e+00> : vector<8x8xf32>
    %55 = tpu.matmul %54, %43, %cst_15 {dimension_numbers = #tpu.dot_dimension_numbers<[1], [0], [0], [1], [0, 0, 1, 1], [], []>} : vector<8x8xbf16>, vector<8x8xbf16>, vector<8x8xf32> -> vector<8x8xf32>
    %56 = tpu.reciprocal %53 {approx = true} : vector<8x1xf32> -> vector<8x1xf32>
    %57 = vector.broadcast %56 : vector<8x1xf32> to vector<8x8xf32>
    %58 = arith.mulf %55, %57 : vector<8x8xf32>
    %59 = vector.extract_strided_slice %1 {offsets = [0, 24], sizes = [8, 8], strides = [1, 1]} : vector<8x96xbf16> to vector<8x8xbf16>
    %60 = vector.extract_strided_slice %1 {offsets = [0, 56], sizes = [8, 8], strides = [1, 1]} : vector<8x96xbf16> to vector<8x8xbf16>
    %61 = vector.extract_strided_slice %1 {offsets = [0, 88], sizes = [8, 8], strides = [1, 1]} : vector<8x96xbf16> to vector<8x8xbf16>
    %cst_16 = arith.constant dense<0.000000e+00> : vector<8x8xf32>
    %62 = tpu.matmul %59, %60, %cst_16 {dimension_numbers = #tpu.dot_dimension_numbers<[1], [1], [0], [0], [0, 0, 1, 0], [], []>} : vector<8x8xbf16>, vector<8x8xbf16>, vector<8x8xf32> -> vector<8x8xf32>
    %cst_17 = arith.constant -1.000000e+30 : f32
    %63 = vector.broadcast %cst_17 : f32 to vector<8x8xf32>
    %64 = arith.select %4, %62, %63 : vector<8x8xi1>, vector<8x8xf32>
    %cst_18 = arith.constant dense<0xFF800000> : vector<8xf32>
    %65 = vector.multi_reduction <maximumf>, %64, %cst_18 [1] : vector<8x8xf32> to vector<8xf32>
    %66 = vector.shape_cast %65 : vector<8xf32> to vector<8x1xf32>
    %67 = vector.broadcast %66 : vector<8x1xf32> to vector<8x8xf32>
    %68 = arith.subf %64, %67 : vector<8x8xf32>
    %69 = math.exp %68 : vector<8x8xf32>
    %cst_19 = arith.constant dense<0.000000e+00> : vector<8xf32>
    %70 = vector.multi_reduction <add>, %69, %cst_19 [1] : vector<8x8xf32> to vector<8xf32>
    %71 = vector.shape_cast %70 : vector<8xf32> to vector<8x1xf32>
    %72 = arith.truncf %69 : vector<8x8xf32> to vector<8x8xbf16>
    %cst_20 = arith.constant dense<0.000000e+00> : vector<8x8xf32>
    %73 = tpu.matmul %72, %61, %cst_20 {dimension_numbers = #tpu.dot_dimension_numbers<[1], [0], [0], [1], [0, 0, 1, 1], [], []>} : vector<8x8xbf16>, vector<8x8xbf16>, vector<8x8xf32> -> vector<8x8xf32>
    %74 = tpu.reciprocal %71 {approx = true} : vector<8x1xf32> -> vector<8x1xf32>
    %75 = vector.broadcast %74 : vector<8x1xf32> to vector<8x8xf32>
    %76 = arith.mulf %73, %75 : vector<8x8xf32>
    %77 = tpu.concatenate %22, %40, %58, %76 in 1 : vector<8x8xf32>, vector<8x8xf32>, vector<8x8xf32>, vector<8x8xf32> -> vector<8x32xf32>
    %78 = arith.truncf %77 : vector<8x32xf32> to vector<8x32xbf16>
    %c0_21 = arith.constant 0 : index
    %c0_22 = arith.constant 0 : index
    %c0_23 = arith.constant 0 : index
    %79 = vector.load %arg2[%c0_21, %c0_22, %c0_23] : memref<1x8x32xbf16, #tpu.memory_space<vmem>>, vector<1x8x32xbf16>
    %80 = vector.shape_cast %79 : vector<1x8x32xbf16> to vector<8x32xbf16>
    %81 = vector.shape_cast %78 : vector<8x32xbf16> to vector<1x8x32xbf16>
    tpu.vector_store %arg2[%c0_21, %c0_22, %c0_23], %81 {strides = array<i32>} : memref<1x8x32xbf16, #tpu.memory_space<vmem>>, vector<1x8x32xbf16>,
    return
  }
  func.func @transform_0(%arg0: i32) -> (i32, i32, i32) {
    %c0_i32 = arith.constant 0 : i32
    %c0_i32_0 = arith.constant 0 : i32
    %c0_i32_1 = arith.constant 0 : i32
    return %arg0, %c0_i32, %c0_i32_0 : i32, i32, i32
  }
  func.func @transform_1(%arg0: i32) -> (i32, i32, i32) {
    %c0_i32 = arith.constant 0 : i32
    %c0_i32_0 = arith.constant 0 : i32
    %c0_i32_1 = arith.constant 0 : i32
    return %arg0, %c0_i32, %c0_i32_0 : i32, i32, i32
  }
}

module attributes {stable_mosaic.version = 11 : i64} {
  func.func @_dense_kernel(%arg0: i32, %arg1: memref<8x16xf32, #tpu.memory_space<vmem>>, %arg2: memref<16x32xbf16, #tpu.memory_space<vmem>>, %arg3: memref<1x32xf32, #tpu.memory_space<vmem>>, %arg4: memref<8x32xf32, #tpu.memory_space<vmem>>) attributes {dimension_semantics = [#tpu.dimension_semantics<parallel>], iteration_bounds = array<i64: 2>, scalar_prefetch = 0 : i64, scratch_operands = 0 : i64, tpu.core_type = #tpu.core_type<tc>, window_params = [{transform_indices = @transform_0, window_bounds = array<i64: 8, 16>}, {pipeline_mode = #tpu.pipeline_mode<synchronous>, transform_indices = @transform_1, window_bounds = array<i64: 16, 32>}, {pipeline_mode = #tpu.pipeline_mode<synchronous>, transform_indices = @transform_2, window_bounds = array<i64: 1, 32>}, {transform_indices = @transform_3, window_bounds = array<i64: 8, 32>}]} {
    %c0 = arith.constant 0 : index
    %c0_0 = arith.constant 0 : index
    %0 = vector.load %arg1[%c0, %c0_0] : memref<8x16xf32, #tpu.memory_space<vmem>>, vector<8x16xf32>
    %1 = arith.truncf %0 : vector<8x16xf32> to vector<8x16xbf16>
    %c0_1 = arith.constant 0 : index
    %c0_2 = arith.constant 0 : index
    %2 = vector.load %arg2[%c0_1, %c0_2] : memref<16x32xbf16, #tpu.memory_space<vmem>>, vector<16x32xbf16>
    %cst = arith.constant dense<0.000000e+00> : vector<8x32xf32>
    %3 = tpu.matmul %1, %2, %cst {dimension_numbers = #tpu.dot_dimension_numbers<[1], [0], [0], [1], [0, 0, 1, 1], [], []>} : vector<8x16xbf16>, vector<16x32xbf16>, vector<8x32xf32> -> vector<8x32xf32>
    %c0_3 = arith.constant 0 : index
    %c0_4 = arith.constant 0 : index
    %4 = vector.load %arg3[%c0_3, %c0_4] : memref<1x32xf32, #tpu.memory_space<vmem>>, vector<1x32xf32>
    %5 = vector.broadcast %4 : vector<1x32xf32> to vector<8x32xf32>
    %6 = arith.addf %3, %5 : vector<8x32xf32>
    %c0_5 = arith.constant 0 : index
    %c0_6 = arith.constant 0 : index
    %7 = vector.load %arg4[%c0_5, %c0_6] : memref<8x32xf32, #tpu.memory_space<vmem>>, vector<8x32xf32>
    tpu.vector_store %arg4[%c0_5, %c0_6], %6 {strides = array<i32>} : memref<8x32xf32, #tpu.memory_space<vmem>>, vector<8x32xf32>,
    return
  }
  func.func @transform_0(%arg0: i32) -> (i32, i32) {
    %c0_i32 = arith.constant 0 : i32
    %c0_i32_0 = arith.constant 0 : i32
    return %arg0, %c0_i32 : i32, i32
  }
  func.func @transform_1(%arg0: i32) -> (i32, i32) {
    %c0_i32 = arith.constant 0 : i32
    %c0_i32_0 = arith.constant 0 : i32
    %c0_i32_1 = arith.constant 0 : i32
    return %c0_i32, %c0_i32_0 : i32, i32
  }
  func.func @transform_2(%arg0: i32) -> (i32, i32) {
    %c0_i32 = arith.constant 0 : i32
    %c0_i32_0 = arith.constant 0 : i32
    %c0_i32_1 = arith.constant 0 : i32
    return %c0_i32, %c0_i32_0 : i32, i32
  }
  func.func @transform_3(%arg0: i32) -> (i32, i32) {
    %c0_i32 = arith.constant 0 : i32
    %c0_i32_0 = arith.constant 0 : i32
    return %arg0, %c0_i32 : i32, i32
  }
}

module attributes {stable_mosaic.version = 11 : i64} {
  func.func @_attn_ffn_kernel(%arg0: i32, %arg1: memref<8x32xbf16, #tpu.memory_space<vmem>>, %arg2: memref<8x32xf32, #tpu.memory_space<vmem>>, %arg3: memref<32x32xbf16, #tpu.memory_space<vmem>>, %arg4: memref<1x32xf32, #tpu.memory_space<vmem>>, %arg5: memref<1x32xf32, #tpu.memory_space<vmem>>, %arg6: memref<1x32xf32, #tpu.memory_space<vmem>>, %arg7: memref<32x32xbf16, #tpu.memory_space<vmem>>, %arg8: memref<1x32xf32, #tpu.memory_space<vmem>>, %arg9: memref<32x32xbf16, #tpu.memory_space<vmem>>, %arg10: memref<1x32xf32, #tpu.memory_space<vmem>>, %arg11: memref<1x32xf32, #tpu.memory_space<vmem>>, %arg12: memref<1x32xf32, #tpu.memory_space<vmem>>, %arg13: memref<8x32xf32, #tpu.memory_space<vmem>>) attributes {dimension_semantics = [#tpu.dimension_semantics<parallel>], iteration_bounds = array<i64: 2>, scalar_prefetch = 0 : i64, scratch_operands = 0 : i64, tpu.core_type = #tpu.core_type<tc>, window_params = [{transform_indices = @transform_0, window_bounds = array<i64: 8, 32>}, {transform_indices = @transform_1, window_bounds = array<i64: 8, 32>}, {pipeline_mode = #tpu.pipeline_mode<synchronous>, transform_indices = @transform_2, window_bounds = array<i64: 32, 32>}, {pipeline_mode = #tpu.pipeline_mode<synchronous>, transform_indices = @transform_3, window_bounds = array<i64: 1, 32>}, {pipeline_mode = #tpu.pipeline_mode<synchronous>, transform_indices = @transform_4, window_bounds = array<i64: 1, 32>}, {pipeline_mode = #tpu.pipeline_mode<synchronous>, transform_indices = @transform_5, window_bounds = array<i64: 1, 32>}, {pipeline_mode = #tpu.pipeline_mode<synchronous>, transform_indices = @transform_6, window_bounds = array<i64: 32, 32>}, {pipeline_mode = #tpu.pipeline_mode<synchronous>, transform_indices = @transform_7, window_bounds = array<i64: 1, 32>}, {pipeline_mode = #tpu.pipeline_mode<synchronous>, transform_indices = @transform_8, window_bounds = array<i64: 32, 32>}, {pipeline_mode = #tpu.pipeline_mode<synchronous>, transform_indices = @transform_9, window_bounds = array<i64: 1, 32>}, {pipeline_mode = #tpu.pipeline_mode<synchronous>, transform_indices = @transform_10, window_bounds = array<i64: 1, 32>}, {pipeline_mode = #tpu.pipeline_mode<synchronous>, transform_indices = @transform_11, window_bounds = array<i64: 1, 32>}, {transform_indices = @transform_12, window_bounds = array<i64: 8, 32>}]} {
    %c0 = arith.constant 0 : index
    %c0_0 = arith.constant 0 : index
    %0 = vector.load %arg1[%c0, %c0_0] : memref<8x32xbf16, #tpu.memory_space<vmem>>, vector<8x32xbf16>
    %c0_1 = arith.constant 0 : index
    %c0_2 = arith.constant 0 : index
    %1 = vector.load %arg3[%c0_1, %c0_2] : memref<32x32xbf16, #tpu.memory_space<vmem>>, vector<32x32xbf16>
    %cst = arith.constant dense<0.000000e+00> : vector<8x32xf32>
    %2 = tpu.matmul %0, %1, %cst {dimension_numbers = #tpu.dot_dimension_numbers<[1], [0], [0], [1], [0, 0, 1, 1], [], []>} : vector<8x32xbf16>, vector<32x32xbf16>, vector<8x32xf32> -> vector<8x32xf32>
    %c0_3 = arith.constant 0 : index
    %c0_4 = arith.constant 0 : index
    %3 = vector.load %arg4[%c0_3, %c0_4] : memref<1x32xf32, #tpu.memory_space<vmem>>, vector<1x32xf32>
    %4 = vector.broadcast %3 : vector<1x32xf32> to vector<8x32xf32>
    %5 = arith.addf %2, %4 : vector<8x32xf32>
    %c0_5 = arith.constant 0 : index
    %c0_6 = arith.constant 0 : index
    %6 = vector.load %arg2[%c0_5, %c0_6] : memref<8x32xf32, #tpu.memory_space<vmem>>, vector<8x32xf32>
    %7 = arith.addf %6, %5 : vector<8x32xf32>
    %cst_7 = arith.constant dense<0.000000e+00> : vector<8xf32>
    %8 = vector.multi_reduction <add>, %7, %cst_7 [1] : vector<8x32xf32> to vector<8xf32>
    %9 = vector.shape_cast %8 : vector<8xf32> to vector<8x1xf32>
    %cst_8 = arith.constant 3.200000e+01 : f32
    %10 = vector.broadcast %cst_8 : f32 to vector<8x1xf32>
    %11 = arith.divf %9, %10 : vector<8x1xf32>
    %12 = arith.mulf %7, %7 : vector<8x32xf32>
    %cst_9 = arith.constant dense<0.000000e+00> : vector<8xf32>
    %13 = vector.multi_reduction <add>, %12, %cst_9 [1] : vector<8x32xf32> to vector<8xf32>
    %14 = vector.shape_cast %13 : vector<8xf32> to vector<8x1xf32>
    %cst_10 = arith.constant 3.200000e+01 : f32
    %15 = vector.broadcast %cst_10 : f32 to vector<8x1xf32>
    %16 = arith.divf %14, %15 : vector<8x1xf32>
    %17 = arith.mulf %11, %11 : vector<8x1xf32>
    %18 = arith.subf %16, %17 : vector<8x1xf32>
    %19 = vector.broadcast %11 : vector<8x1xf32> to vector<8x32xf32>
    %20 = arith.subf %7, %19 : vector<8x32xf32>
    %cst_11 = arith.constant 9.99999974E-6 : f32
    %21 = vector.broadcast %cst_11 : f32 to vector<8x1xf32>
    %22 = arith.addf %18, %21 : vector<8x1xf32>
    %23 = math.rsqrt %22 : vector<8x1xf32>
    %24 = vector.broadcast %23 : vector<8x1xf32> to vector<8x32xf32>
    %25 = arith.mulf %20, %24 : vector<8x32xf32>
    %c0_12 = arith.constant 0 : index
    %c0_13 = arith.constant 0 : index
    %26 = vector.load %arg5[%c0_12, %c0_13] : memref<1x32xf32, #tpu.memory_space<vmem>>, vector<1x32xf32>
    %27 = vector.broadcast %26 : vector<1x32xf32> to vector<8x32xf32>
    %28 = arith.mulf %25, %27 : vector<8x32xf32>
    %c0_14 = arith.constant 0 : index
    %c0_15 = arith.constant 0 : index
    %29 = vector.load %arg6[%c0_14, %c0_15] : memref<1x32xf32, #tpu.memory_space<vmem>>, vector<1x32xf32>
    %30 = vector.broadcast %29 : vector<1x32xf32> to vector<8x32xf32>
    %31 = arith.addf %28, %30 : vector<8x32xf32>
    %32 = arith.truncf %31 : vector<8x32xf32> to vector<8x32xbf16>
    %c0_16 = arith.constant 0 : index
    %c0_17 = arith.constant 0 : index
    %33 = vector.load %arg7[%c0_16, %c0_17] : memref<32x32xbf16, #tpu.memory_space<vmem>>, vector<32x32xbf16>
    %cst_18 = arith.constant dense<0.000000e+00> : vector<8x32xf32>
    %34 = tpu.matmul %32, %33, %cst_18 {dimension_numbers = #tpu.dot_dimension_numbers<[1], [0], [0], [1], [0, 0, 1, 1], [], []>} : vector<8x32xbf16>, vector<32x32xbf16>, vector<8x32xf32> -> vector<8x32xf32>
    %c0_19 = arith.constant 0 : index
    %c0_20 = arith.constant 0 : index
    %35 = vector.load %arg8[%c0_19, %c0_20] : memref<1x32xf32, #tpu.memory_space<vmem>>, vector<1x32xf32>
    %36 = vector.broadcast %35 : vector<1x32xf32> to vector<8x32xf32>
    %37 = arith.addf %34, %36 : vector<8x32xf32>
    %cst_21 = arith.constant 0.000000e+00 : f32
    %38 = vector.broadcast %cst_21 : f32 to vector<8x32xf32>
    %39 = arith.maximumf %37, %38 : vector<8x32xf32>
    %40 = arith.truncf %39 : vector<8x32xf32> to vector<8x32xbf16>
    %c0_22 = arith.constant 0 : index
    %c0_23 = arith.constant 0 : index
    %41 = vector.load %arg9[%c0_22, %c0_23] : memref<32x32xbf16, #tpu.memory_space<vmem>>, vector<32x32xbf16>
    %cst_24 = arith.constant dense<0.000000e+00> : vector<8x32xf32>
    %42 = tpu.matmul %40, %41, %cst_24 {dimension_numbers = #tpu.dot_dimension_numbers<[1], [0], [0], [1], [0, 0, 1, 1], [], []>} : vector<8x32xbf16>, vector<32x32xbf16>, vector<8x32xf32> -> vector<8x32xf32>
    %c0_25 = arith.constant 0 : index
    %c0_26 = arith.constant 0 : index
    %43 = vector.load %arg10[%c0_25, %c0_26] : memref<1x32xf32, #tpu.memory_space<vmem>>, vector<1x32xf32>
    %44 = vector.broadcast %43 : vector<1x32xf32> to vector<8x32xf32>
    %45 = arith.addf %42, %44 : vector<8x32xf32>
    %46 = arith.addf %31, %45 : vector<8x32xf32>
    %cst_27 = arith.constant dense<0.000000e+00> : vector<8xf32>
    %47 = vector.multi_reduction <add>, %46, %cst_27 [1] : vector<8x32xf32> to vector<8xf32>
    %48 = vector.shape_cast %47 : vector<8xf32> to vector<8x1xf32>
    %cst_28 = arith.constant 3.200000e+01 : f32
    %49 = vector.broadcast %cst_28 : f32 to vector<8x1xf32>
    %50 = arith.divf %48, %49 : vector<8x1xf32>
    %51 = arith.mulf %46, %46 : vector<8x32xf32>
    %cst_29 = arith.constant dense<0.000000e+00> : vector<8xf32>
    %52 = vector.multi_reduction <add>, %51, %cst_29 [1] : vector<8x32xf32> to vector<8xf32>
    %53 = vector.shape_cast %52 : vector<8xf32> to vector<8x1xf32>
    %cst_30 = arith.constant 3.200000e+01 : f32
    %54 = vector.broadcast %cst_30 : f32 to vector<8x1xf32>
    %55 = arith.divf %53, %54 : vector<8x1xf32>
    %56 = arith.mulf %50, %50 : vector<8x1xf32>
    %57 = arith.subf %55, %56 : vector<8x1xf32>
    %58 = vector.broadcast %50 : vector<8x1xf32> to vector<8x32xf32>
    %59 = arith.subf %46, %58 : vector<8x32xf32>
    %cst_31 = arith.constant 9.99999974E-6 : f32
    %60 = vector.broadcast %cst_31 : f32 to vector<8x1xf32>
    %61 = arith.addf %57, %60 : vector<8x1xf32>
    %62 = math.rsqrt %61 : vector<8x1xf32>
    %63 = vector.broadcast %62 : vector<8x1xf32> to vector<8x32xf32>
    %64 = arith.mulf %59, %63 : vector<8x32xf32>
    %c0_32 = arith.constant 0 : index
    %c0_33 = arith.constant 0 : index
    %65 = vector.load %arg11[%c0_32, %c0_33] : memref<1x32xf32, #tpu.memory_space<vmem>>, vector<1x32xf32>
    %66 = vector.broadcast %65 : vector<1x32xf32> to vector<8x32xf32>
    %67 = arith.mulf %64, %66 : vector<8x32xf32>
    %c0_34 = arith.constant 0 : index
    %c0_35 = arith.constant 0 : index
    %68 = vector.load %arg12[%c0_34, %c0_35] : memref<1x32xf32, #tpu.memory_space<vmem>>, vector<1x32xf32>
    %69 = vector.broadcast %68 : vector<1x32xf32> to vector<8x32xf32>
    %70 = arith.addf %67, %69 : vector<8x32xf32>
    %c0_36 = arith.constant 0 : index
    %c0_37 = arith.constant 0 : index
    %71 = vector.load %arg13[%c0_36, %c0_37] : memref<8x32xf32, #tpu.memory_space<vmem>>, vector<8x32xf32>
    tpu.vector_store %arg13[%c0_36, %c0_37], %70 {strides = array<i32>} : memref<8x32xf32, #tpu.memory_space<vmem>>, vector<8x32xf32>,
    return
  }
  func.func @transform_0(%arg0: i32) -> (i32, i32) {
    %c0_i32 = arith.constant 0 : i32
    %c0_i32_0 = arith.constant 0 : i32
    return %arg0, %c0_i32 : i32, i32
  }
  func.func @transform_1(%arg0: i32) -> (i32, i32) {
    %c0_i32 = arith.constant 0 : i32
    %c0_i32_0 = arith.constant 0 : i32
    return %arg0, %c0_i32 : i32, i32
  }
  func.func @transform_2(%arg0: i32) -> (i32, i32) {
    %c0_i32 = arith.constant 0 : i32
    %c0_i32_0 = arith.constant 0 : i32
    %c0_i32_1 = arith.constant 0 : i32
    return %c0_i32, %c0_i32_0 : i32, i32
  }
  func.func @transform_3(%arg0: i32) -> (i32, i32) {
    %c0_i32 = arith.constant 0 : i32
    %c0_i32_0 = arith.constant 0 : i32
    %c0_i32_1 = arith.constant 0 : i32
    return %c0_i32, %c0_i32_0 : i32, i32
  }
  func.func @transform_4(%arg0: i32) -> (i32, i32) {
    %c0_i32 = arith.constant 0 : i32
    %c0_i32_0 = arith.constant 0 : i32
    %c0_i32_1 = arith.constant 0 : i32
    return %c0_i32, %c0_i32_0 : i32, i32
  }
  func.func @transform_5(%arg0: i32) -> (i32, i32) {
    %c0_i32 = arith.constant 0 : i32
    %c0_i32_0 = arith.constant 0 : i32
    %c0_i32_1 = arith.constant 0 : i32
    return %c0_i32, %c0_i32_0 : i32, i32
  }
  func.func @transform_6(%arg0: i32) -> (i32, i32) {
    %c0_i32 = arith.constant 0 : i32
    %c0_i32_0 = arith.constant 0 : i32
    %c0_i32_1 = arith.constant 0 : i32
    return %c0_i32, %c0_i32_0 : i32, i32
  }
  func.func @transform_7(%arg0: i32) -> (i32, i32) {
    %c0_i32 = arith.constant 0 : i32
    %c0_i32_0 = arith.constant 0 : i32
    %c0_i32_1 = arith.constant 0 : i32
    return %c0_i32, %c0_i32_0 : i32, i32
  }
  func.func @transform_8(%arg0: i32) -> (i32, i32) {
    %c0_i32 = arith.constant 0 : i32
    %c0_i32_0 = arith.constant 0 : i32
    %c0_i32_1 = arith.constant 0 : i32
    return %c0_i32, %c0_i32_0 : i32, i32
  }
  func.func @transform_9(%arg0: i32) -> (i32, i32) {
    %c0_i32 = arith.constant 0 : i32
    %c0_i32_0 = arith.constant 0 : i32
    %c0_i32_1 = arith.constant 0 : i32
    return %c0_i32, %c0_i32_0 : i32, i32
  }
  func.func @transform_10(%arg0: i32) -> (i32, i32) {
    %c0_i32 = arith.constant 0 : i32
    %c0_i32_0 = arith.constant 0 : i32
    %c0_i32_1 = arith.constant 0 : i32
    return %c0_i32, %c0_i32_0 : i32, i32
  }
  func.func @transform_11(%arg0: i32) -> (i32, i32) {
    %c0_i32 = arith.constant 0 : i32
    %c0_i32_0 = arith.constant 0 : i32
    %c0_i32_1 = arith.constant 0 : i32
    return %c0_i32, %c0_i32_0 : i32, i32
  }
  func.func @transform_12(%arg0: i32) -> (i32, i32) {
    %c0_i32 = arith.constant 0 : i32
    %c0_i32_0 = arith.constant 0 : i32
    return %arg0, %c0_i32 : i32, i32
  }
}

module attributes {stable_mosaic.version = 11 : i64} {
  func.func @_dense_kernel(%arg0: i32, %arg1: memref<8x32xf32, #tpu.memory_space<vmem>>, %arg2: memref<32x8xbf16, #tpu.memory_space<vmem>>, %arg3: memref<1x8xf32, #tpu.memory_space<vmem>>, %arg4: memref<8x8xf32, #tpu.memory_space<vmem>>) attributes {dimension_semantics = [#tpu.dimension_semantics<parallel>], iteration_bounds = array<i64: 2>, scalar_prefetch = 0 : i64, scratch_operands = 0 : i64, tpu.core_type = #tpu.core_type<tc>, window_params = [{transform_indices = @transform_0, window_bounds = array<i64: 8, 32>}, {pipeline_mode = #tpu.pipeline_mode<synchronous>, transform_indices = @transform_1, window_bounds = array<i64: 32, 8>}, {pipeline_mode = #tpu.pipeline_mode<synchronous>, transform_indices = @transform_2, window_bounds = array<i64: 1, 8>}, {transform_indices = @transform_3, window_bounds = array<i64: 8, 8>}]} {
    %c0 = arith.constant 0 : index
    %c0_0 = arith.constant 0 : index
    %0 = vector.load %arg1[%c0, %c0_0] : memref<8x32xf32, #tpu.memory_space<vmem>>, vector<8x32xf32>
    %1 = arith.truncf %0 : vector<8x32xf32> to vector<8x32xbf16>
    %c0_1 = arith.constant 0 : index
    %c0_2 = arith.constant 0 : index
    %2 = vector.load %arg2[%c0_1, %c0_2] : memref<32x8xbf16, #tpu.memory_space<vmem>>, vector<32x8xbf16>
    %cst = arith.constant dense<0.000000e+00> : vector<8x8xf32>
    %3 = tpu.matmul %1, %2, %cst {dimension_numbers = #tpu.dot_dimension_numbers<[1], [0], [0], [1], [0, 0, 1, 1], [], []>} : vector<8x32xbf16>, vector<32x8xbf16>, vector<8x8xf32> -> vector<8x8xf32>
    %c0_3 = arith.constant 0 : index
    %c0_4 = arith.constant 0 : index
    %4 = vector.load %arg3[%c0_3, %c0_4] : memref<1x8xf32, #tpu.memory_space<vmem>>, vector<1x8xf32>
    %5 = vector.broadcast %4 : vector<1x8xf32> to vector<8x8xf32>
    %6 = arith.addf %3, %5 : vector<8x8xf32>
    %c0_5 = arith.constant 0 : index
    %c0_6 = arith.constant 0 : index
    %7 = vector.load %arg4[%c0_5, %c0_6] : memref<8x8xf32, #tpu.memory_space<vmem>>, vector<8x8xf32>
    tpu.vector_store %arg4[%c0_5, %c0_6], %6 {strides = array<i32>} : memref<8x8xf32, #tpu.memory_space<vmem>>, vector<8x8xf32>,
    return
  }
  func.func @transform_0(%arg0: i32) -> (i32, i32) {
    %c0_i32 = arith.constant 0 : i32
    %c0_i32_0 = arith.constant 0 : i32
    return %arg0, %c0_i32 : i32, i32
  }
  func.func @transform_1(%arg0: i32) -> (i32, i32) {
    %c0_i32 = arith.constant 0 : i32
    %c0_i32_0 = arith.constant 0 : i32
    %c0_i32_1 = arith.constant 0 : i32
    return %c0_i32, %c0_i32_0 : i32, i32
  }
  func.func @transform_2(%arg0: i32) -> (i32, i32) {
    %c0_i32 = arith.constant 0 : i32
    %c0_i32_0 = arith.constant 0 : i32
    %c0_i32_1 = arith.constant 0 : i32
    return %c0_i32, %c0_i32_0 : i32, i32
  }
  func.func @transform_3(%arg0: i32) -> (i32, i32) {
    %c0_i32 = arith.constant 0 : i32
    %c0_i32_0 = arith.constant 0 : i32
    return %arg0, %c0_i32 : i32, i32
  }
}

</mosaic_0001>

<llo_original>
// kernel: transformer_forward.10
$region0: #{transformer_forward.10}
  #allocation0 [shape = 'u32[]', space=smem, size = 0x4, offset = 0x4, fixed_abs, tag = 'smem constant byte address 0x4 - core index']
  #allocation1 [shape = 'u32[144,128]{1,0:T(1,128)}', space=vmem, size = 0x12000, scoped, tag = 'internal scratch']
  %s0 = inlined_call_operand.vmem [shape: bf16[2,8,96], index: 0, kind: input, shape index: {}]
  %s1 = inlined_call_operand.vmem [shape: bf16[2,8,32], index: 1, kind: output, shape index: {}]
  %s2 = sld [smem:[#allocation0]]
  $region37: #{transformer_forward.10} parent=0
    _
  %s4 = ssub.s32 1, %s2
  %s5 = scalar_select 0, %s4, %s2
  loop: start=0, step=1, limit=4
  $region2: #{transformer_forward.10} parent=0 // loop_pre_header
    _
  $region3: #{transformer_forward.10} parent=0 // loop_header
    %s7 = sphi 0, %s11
    %p8 = scmp.ge.s32.totalorder %s7, 4
    %s17 = sphi 0, %s19
    %s20 = sphi 0, %s17
    %s21 = sphi 0, %s20
    %s37 = sphi 0, %s21
    %s43 = sphi 0, %s45
    %s46 = sphi 0, %s43
    %s47 = sphi 0, %s46
    %s63 = sphi 0, %s47
  $region4: #{transformer_forward.10} parent=0 // loop_header_branch
    %10 = sbr.rel (%p8) target = $region8
  $region5: #{transformer_forward.10} parent=0 // loop_body
    %s12 = ssub.s32 %s7, 1
    %s13 = ssub.s32 %s7, 2
    %s14 = sadd.s32 %s7, 1
    %s15 = ssub.s32 %s7, %s14
    %p16 = scmp.eq.s32.totalorder %s15, 0
    %s18 = sadd.s32 %s17, 1
    %s19 = scalar_select %p16, %s17, %s18
    %p22 = pneg %p16
    %p23 = scmp.eq.s32.totalorder %s7, 1
    %p24 = por %p22, %p23
    %p25 = scmp.ne.s32.totalorder %s17, %s20
    %p26 = scmp.eq.s32.totalorder %s7, 0
    %p27 = por %p25, %p26
    %p28 = scmp.ne.s32.totalorder %s17, %s20
    %p29 = scmp.eq.s32.totalorder %s12, 1
    %p30 = por %p28, %p29
    %p31 = scmp.ne.s32.totalorder %s20, %s21
    %p32 = scmp.eq.s32.totalorder %s12, 0
    %p33 = por %p31, %p32
    %p34 = scmp.ne.s32.totalorder %s20, %s21
    %p35 = scmp.eq.s32.totalorder %s13, 1
    %p36 = por %p34, %p35
    %p38 = scmp.ne.s32.totalorder %s21, %s37
    %p39 = scmp.eq.s32.totalorder %s13, 0
    %p40 = por %p38, %p39
    %s41 = ssub.s32 %s7, %s14
    %p42 = scmp.eq.s32.totalorder %s41, 0
    %s44 = sadd.s32 %s43, 1
    %s45 = scalar_select %p42, %s43, %s44
    %p48 = pneg %p42
    %p49 = scmp.eq.s32.totalorder %s7, 1
    %p50 = por %p48, %p49
    %p51 = scmp.ne.s32.totalorder %s43, %s46
    %p52 = scmp.eq.s32.totalorder %s7, 0
    %p53 = por %p51, %p52
    %p54 = scmp.ne.s32.totalorder %s43, %s46
    %p55 = scmp.eq.s32.totalorder %s12, 1
    %p56 = por %p54, %p55
    %p57 = scmp.ne.s32.totalorder %s46, %s47
    %p58 = scmp.eq.s32.totalorder %s12, 0
    %p59 = por %p57, %p58
    %p60 = scmp.ne.s32.totalorder %s46, %s47
    %p61 = scmp.eq.s32.totalorder %s13, 1
    %p62 = por %p60, %p61
    %p64 = scmp.ne.s32.totalorder %s47, %s63
    %p65 = scmp.eq.s32.totalorder %s13, 0
    %p66 = por %p64, %p65
    %p67 = scmp.le.s32.totalorder 1, %s7
    %p68 = scmp.lt.s32.totalorder %s7, 3
    %p69 = pnand %p67, %p68
    %p70 = pneg %p69
    // Predicated region
    $region9: #{transformer_forward.10} parent=5 // pred_check
      _
    $region10: #{transformer_forward.10} parent=5 // pred_check_branch
      %72 = sbr.rel (%p69) target = $region12
    $region11: #{transformer_forward.10} parent=5 // pred_region
      %s73 = ssub.s32 %s7, 1
    $region12: #{transformer_forward.10} parent=5 // pred_fallthru
      _
    %p74 = scmp.lt.s32.totalorder %s7, 2
    // Predicated region
    $region13: #{transformer_forward.10} parent=5 // pred_check
      %p75 = pneg %p74
    $region14: #{transformer_forward.10} parent=5 // pred_check_branch
      %77 = sbr.rel (%p75) target = $region16
    $region15: #{transformer_forward.10} parent=5 // pred_region
      // Predicated region
      $region17: #{transformer_forward.10} parent=15 // pred_check
        %p78 = pneg %p27
      $region18: #{transformer_forward.10} parent=15 // pred_check_branch
        %80 = sbr.rel (%p78) target = $region20
      $region19: #{transformer_forward.10} parent=15 // pred_region
        %p81 = scmp.lt.s32.totalorder %s7, 1
        %s82 = scalar_select %p81, %s7, 1
        %s83 = smul.addr %s82, 4
        %s84 = scalar_lea.vmem %s0, %s83
      $region20: #{transformer_forward.10} parent=15 // pred_fallthru
        _
    $region16: #{transformer_forward.10} parent=5 // pred_fallthru
      _
    %p85 = scmp.le.s32.totalorder 1, %s7
    %p86 = scmp.lt.s32.totalorder %s7, 3
    %p87 = pnand %p85, %p86
    %p88 = pneg %p87
    // Predicated region
    $region21: #{transformer_forward.10} parent=5 // pred_check
      _
    $region22: #{transformer_forward.10} parent=5 // pred_check_branch
      %90 = sbr.rel (%p87) target = $region24
    $region23: #{transformer_forward.10} parent=5 // pred_region
      %s91 = ssub.s32 %s7, 1
      %p92 = scmp.lt.s32.totalorder %s12, 1
      %s93 = scalar_select %p92, %s12, 1
      %s94 = smul.addr %s93, 4
      %s95 = scalar_lea.vmem %s0, %s94
      %p96 = pneg %p33
      %p97 = pneg %p30
      %p98 = pneg %p59
      %p99 = pneg %p56
      %p100 = scmp.lt.s32.totalorder %s12, 1
      %s101 = scalar_select %p100, %s12, 1
      %s102 = smul.addr %s101, 4
      %s103 = scalar_lea.vmem %s1, %s102
      %p104 = scmp.lt.s32.totalorder %s12, 1
      %s105 = scalar_select %p104, %s12, 1
      %s106 = smul.addr %s105, 4
      %s107 = scalar_lea.vmem %s0, %s106
      %p108 = scmp.lt.s32.totalorder %s12, 1
      %s109 = scalar_select %p108, %s12, 1
      %s110 = smul.addr %s109, 4
      %s111 = scalar_lea.vmem %s1, %s110
      %v113 = vld [vmem:[%s107] sm:$0xf]
      %v114 = vlaneseq
      %v115 = vshrl.u32 %v114, 7
      %v116 = vlaneseq
      %v117 = vand.u32 %v116, 127
      %vm118 = vcmp.le.s32.totalorder %v117, %v115
      %v120 = vunpack.c.l.b16 %v113
      %v121 = vpack.c.b16 %v120, %v120
      %122 = vrot.lane.b32.xlu0 %v121, 96
      %v123 = vpop.permute.xlu0 %122
      %vm124 = vcmask 64512
      %v126 = vsel %vm124, %v113, 0
      %v129 = vsel %vm124, %v123, 0
      %131 = vmatprep.subr.bf16.mxu0 0
      %132 = vmatpush1.bf16.xpose.msra.mxu0 0
      %133 = vmatprep.subr.bf16.mxu0 0
      %134 = vmatpush1.bf16.xpose.msra.mxu0 0
      %135 = vmatprep.subr.bf16.mxu0 0
      %136 = vmatpush1.bf16.xpose.msra.mxu0 0
      %137 = vmatprep.subr.bf16.mxu0 0
      %138 = vmatpush1.bf16.xpose.msra.mxu0 0
      %139 = vmatprep.subr.bf16.mxu0 0
      %140 = vmatpush1.bf16.xpose.msra.mxu0 0
      %141 = vmatprep.subr.bf16.mxu0 0
      %142 = vmatpush1.bf16.xpose.msra.mxu0 0
      %143 = vmatprep.subr.bf16.mxu0 0
      %144 = vmatpush1.bf16.xpose.msra.mxu0 0
      %145 = vmatprep.subr.bf16.mxu0 0
      %146 = vmatpush1.bf16.xpose.msra.mxu0 %v129
      %147 = vmatprep.subr.bf16.mxu0 0
      %148 = vmatpush2.bf16.xpose.msra.mxu0 0
      %149 = vmatprep.subr.bf16.mxu0 0
      %150 = vmatpush2.bf16.xpose.msra.mxu0 0
      %151 = vmatprep.subr.bf16.mxu0 0
      %152 = vmatpush2.bf16.xpose.msra.mxu0 0
      %153 = vmatprep.subr.bf16.mxu0 0
      %154 = vmatpush2.bf16.xpose.msra.mxu0 0
      %155 = vmatprep.subr.bf16.mxu0 0
      %156 = vmatpush2.bf16.xpose.msra.mxu0 0
      %157 = vmatprep.subr.bf16.mxu0 0
      %158 = vmatpush2.bf16.xpose.msra.mxu0 0
      %159 = vmatprep.subr.bf16.mxu0 0
      %160 = vmatpush2.bf16.xpose.msra.mxu0 0
      %161 = vmatprep.subr.bf16.mxu0 0
      %162 = vmatpush2.bf16.xpose.msra.mxu0 0
      %163 = vmatprep.mubr.bf16.mxu0 0
      %164 = vmatmul.mubr.bf16.gmra.mxu0 %v126
      %v165 = vpop.f32.mrf.mxu0
      %v166 = vadd.f32 0.0, %v165
      %v167 = vpop.f32.mrf.mxu0
      %v168 = vpop.f32.mrf.mxu0
      %v169 = vpop.f32.mrf.mxu0
      %170 = vdwg.mxu0
      %v171 = vsel %vm118, %v166, -1e+30
      %v172 = vsel %vm124, %v171, -inf
      %173 = vmax.xlane.f32.xlu0 %v172
      %v174 = vpop.xlane.xlu0 %173
      %v175 = vsub.f32 %v171, %v174
      %v176 = vmul.f32 %v175, 1.442695
      %v177 = vpow.pop %v176
      %v178 = vsel %vm124, %v177, 0.0
      %179 = vadd.xlane.f32.xlu0 %v178
      %v180 = vpop.xlane.xlu0 %179
      %v181 = vpack.c.bf16 %v177, %v177
      %182 = vrot.lane.b32.xlu0 %v121, 64
      %v183 = vpop.permute.xlu0 %182
      %v185 = vsel %vm124, %v181, 0
      %vm187 = vcmask 1043456
      %v189 = vsel %vm187, %v183, 0
      %191 = vmatprep.subr.bf16.mxu0 0
      %192 = vmatpush1.bf16.msra.mxu0 0
      %193 = vmatprep.subr.bf16.mxu0 0
      %194 = vmatpush1.bf16.msra.mxu0 0
      %195 = vmatprep.subr.bf16.mxu0 0
      %196 = vmatpush1.bf16.msra.mxu0 0
      %197 = vmatprep.subr.bf16.mxu0 0
      %198 = vmatpush1.bf16.msra.mxu0 0
      %199 = vmatprep.subr.bf16.mxu0 0
      %200 = vmatpush1.bf16.msra.mxu0 0
      %201 = vmatprep.subr.bf16.mxu0 0
      %202 = vmatpush1.bf16.msra.mxu0 0
      %203 = vmatprep.subr.bf16.mxu0 0
      %204 = vmatpush1.bf16.msra.mxu0 0
      %205 = vmatprep.subr.bf16.mxu0 0
      %206 = vmatpush1.bf16.msra.mxu0 %v189
      %207 = vmatprep.subr.bf16.mxu0 0
      %208 = vmatpush2.bf16.msra.mxu0 0
      %209 = vmatprep.subr.bf16.mxu0 0
      %210 = vmatpush2.bf16.msra.mxu0 0
      %211 = vmatprep.subr.bf16.mxu0 0
      %212 = vmatpush2.bf16.msra.mxu0 0
      %213 = vmatprep.subr.bf16.mxu0 0
      %214 = vmatpush2.bf16.msra.mxu0 0
      %215 = vmatprep.subr.bf16.mxu0 0
      %216 = vmatpush2.bf16.msra.mxu0 0
      %217 = vmatprep.subr.bf16.mxu0 0
      %218 = vmatpush2.bf16.msra.mxu0 0
      %219 = vmatprep.subr.bf16.mxu0 0
      %220 = vmatpush2.bf16.msra.mxu0 0
      %221 = vmatprep.subr.bf16.mxu0 0
      %222 = vmatpush2.bf16.msra.mxu0 0
      %223 = vmatprep.mubr.bf16.mxu0 0
      %224 = vmatmul.mubr.bf16.gmra.mxu0 %v185
      %v225 = vpop.f32.mrf.mxu0
      %v226 = vadd.f32 0.0, %v225
      %v227 = vpop.f32.mrf.mxu0
      %v228 = vpop.f32.mrf.mxu0
      %v229 = vpop.f32.mrf.mxu0
      %230 = vdwg.mxu0
      %v231 = vrcp.pop %v180
      %v232 = vmul.f32 %v226, %v231
      %233 = vrot.lane.b32.xlu0 %v121, 120
      %v234 = vpop.permute.xlu0 %233
      %235 = vrot.lane.b32.xlu0 %v121, 88
      %v236 = vpop.permute.xlu0 %235
      %v238 = vsel %vm124, %v234, 0
      %v241 = vsel %vm124, %v236, 0
      %243 = vmatprep.subr.bf16.mxu0 0
      %244 = vmatpush1.bf16.xpose.msra.mxu0 0
      %245 = vmatprep.subr.bf16.mxu0 0
      %246 = vmatpush1.bf16.xpose.msra.mxu0 0
      %247 = vmatprep.subr.bf16.mxu0 0
      %248 = vmatpush1.bf16.xpose.msra.mxu0 0
      %249 = vmatprep.subr.bf16.mxu0 0
      %250 = vmatpush1.bf16.xpose.msra.mxu0 0
      %251 = vmatprep.subr.bf16.mxu0 0
      %252 = vmatpush1.bf16.xpose.msra.mxu0 0
      %253 = vmatprep.subr.bf16.mxu0 0
      %254 = vmatpush1.bf16.xpose.msra.mxu0 0
      %255 = vmatprep.subr.bf16.mxu0 0
      %256 = vmatpush1.bf16.xpose.msra.mxu0 0
      %257 = vmatprep.subr.bf16.mxu0 0
      %258 = vmatpush1.bf16.xpose.msra.mxu0 %v241
      %259 = vmatprep.subr.bf16.mxu0 0
      %260 = vmatpush2.bf16.xpose.msra.mxu0 0
      %261 = vmatprep.subr.bf16.mxu0 0
      %262 = vmatpush2.bf16.xpose.msra.mxu0 0
      %263 = vmatprep.subr.bf16.mxu0 0
      %264 = vmatpush2.bf16.xpose.msra.mxu0 0
      %265 = vmatprep.subr.bf16.mxu0 0
      %266 = vmatpush2.bf16.xpose.msra.mxu0 0
      %267 = vmatprep.subr.bf16.mxu0 0
      %268 = vmatpush2.bf16.xpose.msra.mxu0 0
      %269 = vmatprep.subr.bf16.mxu0 0
      %270 = vmatpush2.bf16.xpose.msra.mxu0 0
      %271 = vmatprep.subr.bf16.mxu0 0
      %272 = vmatpush2.bf16.xpose.msra.mxu0 0
      %273 = vmatprep.subr.bf16.mxu0 0
      %274 = vmatpush2.bf16.xpose.msra.mxu0 0
      %275 = vmatprep.mubr.bf16.mxu0 0
      %276 = vmatmul.mubr.bf16.gmra.mxu0 %v238
      %v277 = vpop.f32.mrf.mxu0
      %v278 = vadd.f32 0.0, %v277
      %v279 = vpop.f32.mrf.mxu0
      %v280 = vpop.f32.mrf.mxu0
      %v281 = vpop.f32.mrf.mxu0
      %282 = vdwg.mxu0
      %v283 = vsel %vm118, %v278, -1e+30
      %v284 = vsel %vm124, %v283, -inf
      %285 = vmax.xlane.f32.xlu0 %v284
      %v286 = vpop.xlane.xlu0 %285
      %v287 = vsub.f32 %v283, %v286
      %v288 = vmul.f32 %v287, 1.442695
      %v289 = vpow.pop %v288
      %v290 = vsel %vm124, %v289, 0.0
      %291 = vadd.xlane.f32.xlu0 %v290
      %v292 = vpop.xlane.xlu0 %291
      %v293 = vpack.c.bf16 %v289, %v289
      %294 = vrot.lane.b32.xlu0 %v121, 56
      %v295 = vpop.permute.xlu0 %294
      %v297 = vsel %vm124, %v293, 0
      %v300 = vsel %vm187, %v295, 0
      %302 = vmatprep.subr.bf16.mxu0 0
      %303 = vmatpush1.bf16.msra.mxu0 0
      %304 = vmatprep.subr.bf16.mxu0 0
      %305 = vmatpush1.bf16.msra.mxu0 0
      %306 = vmatprep.subr.bf16.mxu0 0
      %307 = vmatpush1.bf16.msra.mxu0 0
      %308 = vmatprep.subr.bf16.mxu0 0
      %309 = vmatpush1.bf16.msra.mxu0 0
      %310 = vmatprep.subr.bf16.mxu0 0
      %311 = vmatpush1.bf16.msra.mxu0 0
      %312 = vmatprep.subr.bf16.mxu0 0
      %313 = vmatpush1.bf16.msra.mxu0 0
      %314 = vmatprep.subr.bf16.mxu0 0
      %315 = vmatpush1.bf16.msra.mxu0 0
      %316 = vmatprep.subr.bf16.mxu0 0
      %317 = vmatpush1.bf16.msra.mxu0 %v300
      %318 = vmatprep.subr.bf16.mxu0 0
      %319 = vmatpush2.bf16.msra.mxu0 0
      %320 = vmatprep.subr.bf16.mxu0 0
      %321 = vmatpush2.bf16.msra.mxu0 0
      %322 = vmatprep.subr.bf16.mxu0 0
      %323 = vmatpush2.bf16.msra.mxu0 0
      %324 = vmatprep.subr.bf16.mxu0 0
      %325 = vmatpush2.bf16.msra.mxu0 0
      %326 = vmatprep.subr.bf16.mxu0 0
      %327 = vmatpush2.bf16.msra.mxu0 0
      %328 = vmatprep.subr.bf16.mxu0 0
      %329 = vmatpush2.bf16.msra.mxu0 0
      %330 = vmatprep.subr.bf16.mxu0 0
      %331 = vmatpush2.bf16.msra.mxu0 0
      %332 = vmatprep.subr.bf16.mxu0 0
      %333 = vmatpush2.bf16.msra.mxu0 0
      %334 = vmatprep.mubr.bf16.mxu0 0
      %335 = vmatmul.mubr.bf16.gmra.mxu0 %v297
      %v336 = vpop.f32.mrf.mxu0
      %v337 = vadd.f32 0.0, %v336
      %v338 = vpop.f32.mrf.mxu0
      %v339 = vpop.f32.mrf.mxu0
      %v340 = vpop.f32.mrf.mxu0
      %341 = vdwg.mxu0
      %v342 = vrcp.pop %v292
      %v343 = vmul.f32 %v337, %v342
      %344 = vrot.lane.b32.xlu0 %v121, 112
      %v345 = vpop.permute.xlu0 %344
      %346 = vrot.lane.b32.xlu0 %v121, 80
      %v347 = vpop.permute.xlu0 %346
      %v349 = vsel %vm124, %v345, 0
      %v352 = vsel %vm124, %v347, 0
      %354 = vmatprep.subr.bf16.mxu0 0
      %355 = vmatpush1.bf16.xpose.msra.mxu0 0
      %356 = vmatprep.subr.bf16.mxu0 0
      %357 = vmatpush1.bf16.xpose.msra.mxu0 0
      %358 = vmatprep.subr.bf16.mxu0 0
      %359 = vmatpush1.bf16.xpose.msra.mxu0 0
      %360 = vmatprep.subr.bf16.mxu0 0
      %361 = vmatpush1.bf16.xpose.msra.mxu0 0
      %362 = vmatprep.subr.bf16.mxu0 0
      %363 = vmatpush1.bf16.xpose.msra.mxu0 0
      %364 = vmatprep.subr.bf16.mxu0 0
      %365 = vmatpush1.bf16.xpose.msra.mxu0 0
      %366 = vmatprep.subr.bf16.mxu0 0
      %367 = vmatpush1.bf16.xpose.msra.mxu0 0
      %368 = vmatprep.subr.bf16.mxu0 0
      %369 = vmatpush1.bf16.xpose.msra.mxu0 %v352
      %370 = vmatprep.subr.bf16.mxu0 0
      %371 = vmatpush2.bf16.xpose.msra.mxu0 0
      %372 = vmatprep.subr.bf16.mxu0 0
      %373 = vmatpush2.bf16.xpose.msra.mxu0 0
      %374 = vmatprep.subr.bf16.mxu0 0
      %375 = vmatpush2.bf16.xpose.msra.mxu0 0
      %376 = vmatprep.subr.bf16.mxu0 0
      %377 = vmatpush2.bf16.xpose.msra.mxu0 0
      %378 = vmatprep.subr.bf16.mxu0 0
      %379 = vmatpush2.bf16.xpose.msra.mxu0 0
      %380 = vmatprep.subr.bf16.mxu0 0
      %381 = vmatpush2.bf16.xpose.msra.mxu0 0
      %382 = vmatprep.subr.bf16.mxu0 0
      %383 = vmatpush2.bf16.xpose.msra.mxu0 0
      %384 = vmatprep.subr.bf16.mxu0 0
      %385 = vmatpush2.bf16.xpose.msra.mxu0 0
      %386 = vmatprep.mubr.bf16.mxu0 0
      %387 = vmatmul.mubr.bf16.gmra.mxu0 %v349
      %v388 = vpop.f32.mrf.mxu0
      %v389 = vadd.f32 0.0, %v388
      %v390 = vpop.f32.mrf.mxu0
      %v391 = vpop.f32.mrf.mxu0
      %v392 = vpop.f32.mrf.mxu0
      %393 = vdwg.mxu0
      %v394 = vsel %vm118, %v389, -1e+30
      %v395 = vsel %vm124, %v394, -inf
      %396 = vmax.xlane.f32.xlu0 %v395
      %v397 = vpop.xlane.xlu0 %396
      %v398 = vsub.f32 %v394, %v397
      %v399 = vmul.f32 %v398, 1.442695
      %v400 = vpow.pop %v399
      %v401 = vsel %vm124, %v400, 0.0
      %402 = vadd.xlane.f32.xlu0 %v401
      %v403 = vpop.xlane.xlu0 %402
      %v404 = vpack.c.bf16 %v400, %v400
      %405 = vrot.lane.b32.xlu0 %v121, 48
      %v406 = vpop.permute.xlu0 %405
      %v408 = vsel %vm124, %v404, 0
      %v411 = vsel %vm187, %v406, 0
      %413 = vmatprep.subr.bf16.mxu0 0
      %414 = vmatpush1.bf16.msra.mxu0 0
      %415 = vmatprep.subr.bf16.mxu0 0
      %416 = vmatpush1.bf16.msra.mxu0 0
      %417 = vmatprep.subr.bf16.mxu0 0
      %418 = vmatpush1.bf16.msra.mxu0 0
      %419 = vmatprep.subr.bf16.mxu0 0
      %420 = vmatpush1.bf16.msra.mxu0 0
      %421 = vmatprep.subr.bf16.mxu0 0
      %422 = vmatpush1.bf16.msra.mxu0 0
      %423 = vmatprep.subr.bf16.mxu0 0
      %424 = vmatpush1.bf16.msra.mxu0 0
      %425 = vmatprep.subr.bf16.mxu0 0
      %426 = vmatpush1.bf16.msra.mxu0 0
      %427 = vmatprep.subr.bf16.mxu0 0
      %428 = vmatpush1.bf16.msra.mxu0 %v411
      %429 = vmatprep.subr.bf16.mxu0 0
      %430 = vmatpush2.bf16.msra.mxu0 0
      %431 = vmatprep.subr.bf16.mxu0 0
      %432 = vmatpush2.bf16.msra.mxu0 0
      %433 = vmatprep.subr.bf16.mxu0 0
      %434 = vmatpush2.bf16.msra.mxu0 0
      %435 = vmatprep.subr.bf16.mxu0 0
      %436 = vmatpush2.bf16.msra.mxu0 0
      %437 = vmatprep.subr.bf16.mxu0 0
      %438 = vmatpush2.bf16.msra.mxu0 0
      %439 = vmatprep.subr.bf16.mxu0 0
      %440 = vmatpush2.bf16.msra.mxu0 0
      %441 = vmatprep.subr.bf16.mxu0 0
      %442 = vmatpush2.bf16.msra.mxu0 0
      %443 = vmatprep.subr.bf16.mxu0 0
      %444 = vmatpush2.bf16.msra.mxu0 0
      %445 = vmatprep.mubr.bf16.mxu0 0
      %446 = vmatmul.mubr.bf16.gmra.mxu0 %v408
      %v447 = vpop.f32.mrf.mxu0
      %v448 = vadd.f32 0.0, %v447
      %v449 = vpop.f32.mrf.mxu0
      %v450 = vpop.f32.mrf.mxu0
      %v451 = vpop.f32.mrf.mxu0
      %452 = vdwg.mxu0
      %v453 = vrcp.pop %v403
      %v454 = vmul.f32 %v448, %v453
      %455 = vrot.lane.b32.xlu0 %v121, 104
      %v456 = vpop.permute.xlu0 %455
      %457 = vrot.lane.b32.xlu0 %v121, 72
      %v458 = vpop.permute.xlu0 %457
      %v460 = vsel %vm124, %v456, 0
      %v463 = vsel %vm124, %v458, 0
      %465 = vmatprep.subr.bf16.mxu0 0
      %466 = vmatpush1.bf16.xpose.msra.mxu0 0
      %467 = vmatprep.subr.bf16.mxu0 0
      %468 = vmatpush1.bf16.xpose.msra.mxu0 0
      %469 = vmatprep.subr.bf16.mxu0 0
      %470 = vmatpush1.bf16.xpose.msra.mxu0 0
      %471 = vmatprep.subr.bf16.mxu0 0
      %472 = vmatpush1.bf16.xpose.msra.mxu0 0
      %473 = vmatprep.subr.bf16.mxu0 0
      %474 = vmatpush1.bf16.xpose.msra.mxu0 0
      %475 = vmatprep.subr.bf16.mxu0 0
      %476 = vmatpush1.bf16.xpose.msra.mxu0 0
      %477 = vmatprep.subr.bf16.mxu0 0
      %478 = vmatpush1.bf16.xpose.msra.mxu0 0
      %479 = vmatprep.subr.bf16.mxu0 0
      %480 = vmatpush1.bf16.xpose.msra.mxu0 %v463
      %481 = vmatprep.subr.bf16.mxu0 0
      %482 = vmatpush2.bf16.xpose.msra.mxu0 0
      %483 = vmatprep.subr.bf16.mxu0 0
      %484 = vmatpush2.bf16.xpose.msra.mxu0 0
      %485 = vmatprep.subr.bf16.mxu0 0
      %486 = vmatpush2.bf16.xpose.msra.mxu0 0
      %487 = vmatprep.subr.bf16.mxu0 0
      %488 = vmatpush2.bf16.xpose.msra.mxu0 0
      %489 = vmatprep.subr.bf16.mxu0 0
      %490 = vmatpush2.bf16.xpose.msra.mxu0 0
      %491 = vmatprep.subr.bf16.mxu0 0
      %492 = vmatpush2.bf16.xpose.msra.mxu0 0
      %493 = vmatprep.subr.bf16.mxu0 0
      %494 = vmatpush2.bf16.xpose.msra.mxu0 0
      %495 = vmatprep.subr.bf16.mxu0 0
      %496 = vmatpush2.bf16.xpose.msra.mxu0 0
      %497 = vmatprep.mubr.bf16.mxu0 0
      %498 = vmatmul.mubr.bf16.gmra.mxu0 %v460
      %v499 = vpop.f32.mrf.mxu0
      %v500 = vadd.f32 0.0, %v499
      %v501 = vpop.f32.mrf.mxu0
      %v502 = vpop.f32.mrf.mxu0
      %v503 = vpop.f32.mrf.mxu0
      %504 = vdwg.mxu0
      %v505 = vsel %vm118, %v500, -1e+30
      %v506 = vsel %vm124, %v505, -inf
      %507 = vmax.xlane.f32.xlu0 %v506
      %v508 = vpop.xlane.xlu0 %507
      %v509 = vsub.f32 %v505, %v508
      %v510 = vmul.f32 %v509, 1.442695
      %v511 = vpow.pop %v510
      %v512 = vsel %vm124, %v511, 0.0
      %513 = vadd.xlane.f32.xlu0 %v512
      %v514 = vpop.xlane.xlu0 %513
      %v515 = vpack.c.bf16 %v511, %v511
      %516 = vrot.lane.b32.xlu0 %v121, 40
      %v517 = vpop.permute.xlu0 %516
      %v519 = vsel %vm124, %v515, 0
      %v522 = vsel %vm187, %v517, 0
      %524 = vmatprep.subr.bf16.mxu0 0
      %525 = vmatpush1.bf16.msra.mxu0 0
      %526 = vmatprep.subr.bf16.mxu0 0
      %527 = vmatpush1.bf16.msra.mxu0 0
      %528 = vmatprep.subr.bf16.mxu0 0
      %529 = vmatpush1.bf16.msra.mxu0 0
      %530 = vmatprep.subr.bf16.mxu0 0
      %531 = vmatpush1.bf16.msra.mxu0 0
      %532 = vmatprep.subr.bf16.mxu0 0
      %533 = vmatpush1.bf16.msra.mxu0 0
      %534 = vmatprep.subr.bf16.mxu0 0
      %535 = vmatpush1.bf16.msra.mxu0 0
      %536 = vmatprep.subr.bf16.mxu0 0
      %537 = vmatpush1.bf16.msra.mxu0 0
      %538 = vmatprep.subr.bf16.mxu0 0
      %539 = vmatpush1.bf16.msra.mxu0 %v522
      %540 = vmatprep.subr.bf16.mxu0 0
      %541 = vmatpush2.bf16.msra.mxu0 0
      %542 = vmatprep.subr.bf16.mxu0 0
      %543 = vmatpush2.bf16.msra.mxu0 0
      %544 = vmatprep.subr.bf16.mxu0 0
      %545 = vmatpush2.bf16.msra.mxu0 0
      %546 = vmatprep.subr.bf16.mxu0 0
      %547 = vmatpush2.bf16.msra.mxu0 0
      %548 = vmatprep.subr.bf16.mxu0 0
      %549 = vmatpush2.bf16.msra.mxu0 0
      %550 = vmatprep.subr.bf16.mxu0 0
      %551 = vmatpush2.bf16.msra.mxu0 0
      %552 = vmatprep.subr.bf16.mxu0 0
      %553 = vmatpush2.bf16.msra.mxu0 0
      %554 = vmatprep.subr.bf16.mxu0 0
      %555 = vmatpush2.bf16.msra.mxu0 0
      %556 = vmatprep.mubr.bf16.mxu0 0
      %557 = vmatmul.mubr.bf16.gmra.mxu0 %v519
      %v558 = vpop.f32.mrf.mxu0
      %v559 = vadd.f32 0.0, %v558
      %v560 = vpop.f32.mrf.mxu0
      %v561 = vpop.f32.mrf.mxu0
      %v562 = vpop.f32.mrf.mxu0
      %563 = vdwg.mxu0
      %v564 = vrcp.pop %v514
      %v565 = vmul.f32 %v559, %v564
      %567 = vrot.lane.b32.xlu0 %v343, 8
      %v568 = vpop.permute.xlu0 %567
      %571 = vrot.lane.b32.xlu0 %v454, 16
      %v572 = vpop.permute.xlu0 %571
      %575 = vrot.lane.b32.xlu0 %v565, 24
      %v576 = vpop.permute.xlu0 %575
      %v578 = vsel %vm124, %v232, %v568
      %vm579 = vcmask 130048
      %v580 = vsel %vm579, %v578, %v572
      %vm581 = vcmask 195584
      %v582 = vsel %vm581, %v580, %v576
      %v583 = vpack.c.bf16 %v582, %v582
      %vm584 = vcmask 257024
      %585 = vst.msk [vmem:[%s111] sm:$0xf] %vm584, %v583
      %p586 = scmp.lt.s32.totalorder %s12, 1
      %s587 = scalar_select %p586, %s12, 1
      %s588 = smul.addr %s587, 4
      %s589 = scalar_lea.vmem %s1, %s588
      // Predicated region
      $region25: #{transformer_forward.10} parent=23 // pred_check
        %p590 = pneg %p56
      $region26: #{transformer_forward.10} parent=23 // pred_check_branch
        %592 = sbr.rel (%p590) target = $region28
      $region27: #{transformer_forward.10} parent=23 // pred_region
        _
      $region28: #{transformer_forward.10} parent=23 // pred_fallthru
        _
    $region24: #{transformer_forward.10} parent=5 // pred_fallthru
      _
    %p593 = scmp.le.s32.totalorder 2, %s7
    // Predicated region
    $region29: #{transformer_forward.10} parent=5 // pred_check
      %p594 = pneg %p593
    $region30: #{transformer_forward.10} parent=5 // pred_check_branch
      %596 = sbr.rel (%p594) target = $region32
    $region31: #{transformer_forward.10} parent=5 // pred_region
      %s597 = ssub.s32 %s7, 2
      // Predicated region
      $region33: #{transformer_forward.10} parent=31 // pred_check
        %p598 = pneg %p62
      $region34: #{transformer_forward.10} parent=31 // pred_check_branch
        %600 = sbr.rel (%p598) target = $region36
      $region35: #{transformer_forward.10} parent=31 // pred_region
        %p601 = scmp.lt.s32.totalorder %s13, 1
        %s602 = scalar_select %p601, %s13, 1
        %s603 = smul.addr %s602, 4
        %s604 = scalar_lea.vmem %s1, %s603
      $region36: #{transformer_forward.10} parent=31 // pred_fallthru
        _
    $region32: #{transformer_forward.10} parent=5 // pred_fallthru
      _
  $region6: #{transformer_forward.10} parent=0 // loop_footer
    %s11 = sadd.s32 1, %s7
  $region7: #{transformer_forward.10} parent=0 // loop_footer_branch
    %6 = sbr.rel target = $region3
  $region8: #{transformer_forward.10} parent=0 // loop_exit
    _

// kernel: transformer_forward.9
$region0: #{transformer_forward.9}
  #allocation0 [shape = 'u32[]', space=smem, size = 0x4, offset = 0x4, fixed_abs, tag = 'smem constant byte address 0x4 - core index']
  #allocation1 [shape = 'u32[144,128]{1,0:T(1,128)}', space=vmem, size = 0x12000, scoped, tag = 'internal scratch']
  %s0 = inlined_call_operand.vmem [shape: f32[16,32], index: 0, kind: input, shape index: {}]
  %s1 = inlined_call_operand.vmem [shape: bf16[32,96], index: 1, kind: input, shape index: {}]
  %s2 = inlined_call_operand.vmem [shape: f32[1,96], index: 2, kind: input, shape index: {}]
  %s3 = inlined_call_operand.vmem [shape: bf16[16,96], index: 3, kind: output, shape index: {}]
  %s4 = sld [smem:[#allocation0]]
  $region45: #{transformer_forward.9} parent=0
    _
  %s6 = ssub.s32 1, %s4
  %s7 = scalar_select 0, %s6, %s4
  loop: start=0, step=1, limit=4
  $region2: #{transformer_forward.9} parent=0 // loop_pre_header
    _
  $region3: #{transformer_forward.9} parent=0 // loop_header
    %s9 = sphi 0, %s13
    %p10 = scmp.ge.s32.totalorder %s9, 4
    %s19 = sphi 0, %s21
    %s22 = sphi 0, %s19
    %s23 = sphi 0, %s22
    %s39 = sphi 0, %s23
    %s43 = sphi 0, %s43
    %s45 = sphi 0, %s43
    %s46 = sphi 0, %s45
    %s60 = sphi 0, %s46
    %s64 = sphi 0, %s64
    %s66 = sphi 0, %s64
    %s67 = sphi 0, %s66
    %s81 = sphi 0, %s67
    %s87 = sphi 0, %s89
    %s90 = sphi 0, %s87
    %s91 = sphi 0, %s90
    %s107 = sphi 0, %s91
  $region4: #{transformer_forward.9} parent=0 // loop_header_branch
    %12 = sbr.rel (%p10) target = $region8
  $region5: #{transformer_forward.9} parent=0 // loop_body
    %s14 = ssub.s32 %s9, 1
    %s15 = ssub.s32 %s9, 2
    %s16 = sadd.s32 %s9, 1
    %s17 = ssub.s32 %s9, %s16
    %p18 = scmp.eq.s32.totalorder %s17, 0
    %s20 = sadd.s32 %s19, 1
    %s21 = scalar_select %p18, %s19, %s20
    %p24 = pneg %p18
    %p25 = scmp.eq.s32.totalorder %s9, 1
    %p26 = por %p24, %p25
    %p27 = scmp.ne.s32.totalorder %s19, %s22
    %p28 = scmp.eq.s32.totalorder %s9, 0
    %p29 = por %p27, %p28
    %p30 = scmp.ne.s32.totalorder %s19, %s22
    %p31 = scmp.eq.s32.totalorder %s14, 1
    %p32 = por %p30, %p31
    %p33 = scmp.ne.s32.totalorder %s22, %s23
    %p34 = scmp.eq.s32.totalorder %s14, 0
    %p35 = por %p33, %p34
    %p36 = scmp.ne.s32.totalorder %s22, %s23
    %p37 = scmp.eq.s32.totalorder %s15, 1
    %p38 = por %p36, %p37
    %p40 = scmp.ne.s32.totalorder %s23, %s39
    %p41 = scmp.eq.s32.totalorder %s15, 0
    %p42 = por %p40, %p41
    %s44 = sadd.s32 %s43, 1
    %p47 = scmp.eq.s32.totalorder %s9, 1
    %p48 = scmp.ne.s32.totalorder %s43, %s45
    %p49 = scmp.eq.s32.totalorder %s9, 0
    %p50 = por %p48, %p49
    %p51 = scmp.ne.s32.totalorder %s43, %s45
    %p52 = scmp.eq.s32.totalorder %s14, 1
    %p53 = por %p51, %p52
    %p54 = scmp.ne.s32.totalorder %s45, %s46
    %p55 = scmp.eq.s32.totalorder %s14, 0
    %p56 = por %p54, %p55
    %p57 = scmp.ne.s32.totalorder %s45, %s46
    %p58 = scmp.eq.s32.totalorder %s15, 1
    %p59 = por %p57, %p58
    %p61 = scmp.ne.s32.totalorder %s46, %s60
    %p62 = scmp.eq.s32.totalorder %s15, 0
    %p63 = por %p61, %p62
    %s65 = sadd.s32 %s64, 1
    %p68 = scmp.eq.s32.totalorder %s9, 1
    %p69 = scmp.ne.s32.totalorder %s64, %s66
    %p70 = scmp.eq.s32.totalorder %s9, 0
    %p71 = por %p69, %p70
    %p72 = scmp.ne.s32.totalorder %s64, %s66
    %p73 = scmp.eq.s32.totalorder %s14, 1
    %p74 = por %p72, %p73
    %p75 = scmp.ne.s32.totalorder %s66, %s67
    %p76 = scmp.eq.s32.totalorder %s14, 0
    %p77 = por %p75, %p76
    %p78 = scmp.ne.s32.totalorder %s66, %s67
    %p79 = scmp.eq.s32.totalorder %s15, 1
    %p80 = por %p78, %p79
    %p82 = scmp.ne.s32.totalorder %s67, %s81
    %p83 = scmp.eq.s32.totalorder %s15, 0
    %p84 = por %p82, %p83
    %s85 = ssub.s32 %s9, %s16
    %p86 = scmp.eq.s32.totalorder %s85, 0
    %s88 = sadd.s32 %s87, 1
    %s89 = scalar_select %p86, %s87, %s88
    %p92 = pneg %p86
    %p93 = scmp.eq.s32.totalorder %s9, 1
    %p94 = por %p92, %p93
    %p95 = scmp.ne.s32.totalorder %s87, %s90
    %p96 = scmp.eq.s32.totalorder %s9, 0
    %p97 = por %p95, %p96
    %p98 = scmp.ne.s32.totalorder %s87, %s90
    %p99 = scmp.eq.s32.totalorder %s14, 1
    %p100 = por %p98, %p99
    %p101 = scmp.ne.s32.totalorder %s90, %s91
    %p102 = scmp.eq.s32.totalorder %s14, 0
    %p103 = por %p101, %p102
    %p104 = scmp.ne.s32.totalorder %s90, %s91
    %p105 = scmp.eq.s32.totalorder %s15, 1
    %p106 = por %p104, %p105
    %p108 = scmp.ne.s32.totalorder %s91, %s107
    %p109 = scmp.eq.s32.totalorder %s15, 0
    %p110 = por %p108, %p109
    %p111 = scmp.le.s32.totalorder 1, %s9
    %p112 = scmp.lt.s32.totalorder %s9, 3
    %p113 = pnand %p111, %p112
    %p114 = pneg %p113
    // Predicated region
    $region9: #{transformer_forward.9} parent=5 // pred_check
      _
    $region10: #{transformer_forward.9} parent=5 // pred_check_branch
      %116 = sbr.rel (%p113) target = $region12
    $region11: #{transformer_forward.9} parent=5 // pred_region
      %s117 = ssub.s32 %s9, 1
      // Predicated region
      $region13: #{transformer_forward.9} parent=11 // pred_check
        %p118 = pneg %p56
      $region14: #{transformer_forward.9} parent=11 // pred_check_branch
        %120 = sbr.rel (%p118) target = $region16
      $region15: #{transformer_forward.9} parent=11 // pred_region
        _
      $region16: #{transformer_forward.9} parent=11 // pred_fallthru
        _
      // Predicated region
      $region17: #{transformer_forward.9} parent=11 // pred_check
        %p121 = pneg %p77
      $region18: #{transformer_forward.9} parent=11 // pred_check_branch
        %123 = sbr.rel (%p121) target = $region20
      $region19: #{transformer_forward.9} parent=11 // pred_region
        _
      $region20: #{transformer_forward.9} parent=11 // pred_fallthru
        _
    $region12: #{transformer_forward.9} parent=5 // pred_fallthru
      _
    %p124 = scmp.lt.s32.totalorder %s9, 2
    // Predicated region
    $region21: #{transformer_forward.9} parent=5 // pred_check
      %p125 = pneg %p124
    $region22: #{transformer_forward.9} parent=5 // pred_check_branch
      %127 = sbr.rel (%p125) target = $region24
    $region23: #{transformer_forward.9} parent=5 // pred_region
      // Predicated region
      $region25: #{transformer_forward.9} parent=23 // pred_check
        %p128 = pneg %p29
      $region26: #{transformer_forward.9} parent=23 // pred_check_branch
        %130 = sbr.rel (%p128) target = $region28
      $region27: #{transformer_forward.9} parent=23 // pred_region
        %p131 = scmp.lt.s32.totalorder %s9, 1
        %s132 = scalar_select %p131, %s9, 1
        %s133 = smul.addr %s132, 8
        %s134 = scalar_lea.vmem %s0, %s133
      $region28: #{transformer_forward.9} parent=23 // pred_fallthru
        _
    $region24: #{transformer_forward.9} parent=5 // pred_fallthru
      _
    %p135 = scmp.le.s32.totalorder 1, %s9
    %p136 = scmp.lt.s32.totalorder %s9, 3
    %p137 = pnand %p135, %p136
    %p138 = pneg %p137
    // Predicated region
    $region29: #{transformer_forward.9} parent=5 // pred_check
      _
    $region30: #{transformer_forward.9} parent=5 // pred_check_branch
      %140 = sbr.rel (%p137) target = $region32
    $region31: #{transformer_forward.9} parent=5 // pred_region
      %s141 = ssub.s32 %s9, 1
      %p142 = scmp.lt.s32.totalorder %s14, 1
      %s143 = scalar_select %p142, %s14, 1
      %s144 = smul.addr %s143, 8
      %s145 = scalar_lea.vmem %s0, %s144
      %p146 = pneg %p35
      %p147 = pneg %p32
      %p148 = pneg %p56
      %p149 = pneg %p53
      %p150 = pneg %p77
      %p151 = pneg %p74
      %p152 = pneg %p103
      %p153 = pneg %p100
      %p154 = scmp.lt.s32.totalorder %s14, 1
      %s155 = scalar_select %p154, %s14, 1
      %s156 = smul.addr %s155, 4
      %s157 = scalar_lea.vmem %s3, %s156
      %p158 = scmp.lt.s32.totalorder %s14, 1
      %s159 = scalar_select %p158, %s14, 1
      %s160 = smul.addr %s159, 8
      %s161 = scalar_lea.vmem %s0, %s160
      %p162 = scmp.lt.s32.totalorder %s14, 1
      %s163 = scalar_select %p162, %s14, 1
      %s164 = smul.addr %s163, 4
      %s165 = scalar_lea.vmem %s3, %s164
      %v167 = vld [vmem:[%s161] sm:$0xff]
      %v168 = vpack.c.bf16 %v167, %v167
      %v169 = vld [vmem:[%s1] sm:$0xf]
      %v170 = vld [vmem:[%s1 + $0x4] sm:$0xf]
      %v171 = vld [vmem:[%s1 + $0x8] sm:$0xf]
      %v172 = vld [vmem:[%s1 + $0xc] sm:$0xf]
      %v173 = vld [vmem:[%s2] sm:$0x1]
      %v175 = vlaneseq
      %v176 = vshrl.u32 %v175, 7
      %v177 = vsub.s32 0, %v176
      %v178 = vrot.slane %v173, %v177
      %v184 = vunpack.c.l.b16 %v169
      %v185 = vunpack.c.l.b16 %v170
      %v186 = vunpack.c.l.b16 %v171
      %v187 = vunpack.c.l.b16 %v172
      %v188 = vpack.c.b16 %v185, %v184
      %v189 = vpack.c.b16 %v187, %v186
      %vm192 = vcmask 261120
      %v194 = vsel %vm192, %v168, 0
      %196 = vmatprep.subr.bf16.mxu0 0
      %197 = vmatpush1.bf16.msra.mxu0 0
      %198 = vmatprep.subr.bf16.mxu0 0
      %199 = vmatpush1.bf16.msra.mxu0 0
      %200 = vmatprep.subr.bf16.mxu0 0
      %201 = vmatpush1.bf16.msra.mxu0 0
      %202 = vmatprep.subr.bf16.mxu0 0
      %203 = vmatpush1.bf16.msra.mxu0 0
      %204 = vmatprep.subr.bf16.mxu0 0
      %205 = vmatpush1.bf16.msra.mxu0 0
      %206 = vmatprep.subr.bf16.mxu0 0
      %207 = vmatpush1.bf16.msra.mxu0 0
      %208 = vmatprep.subr.bf16.mxu0 0
      %209 = vmatpush1.bf16.msra.mxu0 %v189
      %210 = vmatprep.subr.bf16.mxu0 0
      %211 = vmatpush1.bf16.msra.mxu0 %v188
      %212 = vmatprep.subr.bf16.mxu0 0
      %213 = vmatpush2.bf16.msra.mxu0 0
      %214 = vmatprep.subr.bf16.mxu0 0
      %215 = vmatpush2.bf16.msra.mxu0 0
      %216 = vmatprep.subr.bf16.mxu0 0
      %217 = vmatpush2.bf16.msra.mxu0 0
      %218 = vmatprep.subr.bf16.mxu0 0
      %219 = vmatpush2.bf16.msra.mxu0 0
      %220 = vmatprep.subr.bf16.mxu0 0
      %221 = vmatpush2.bf16.msra.mxu0 0
      %222 = vmatprep.subr.bf16.mxu0 0
      %223 = vmatpush2.bf16.msra.mxu0 0
      %224 = vmatprep.subr.bf16.mxu0 0
      %225 = vmatpush2.bf16.msra.mxu0 0
      %226 = vmatprep.subr.bf16.mxu0 0
      %227 = vmatpush2.bf16.msra.mxu0 0
      %228 = vmatprep.mubr.bf16.mxu0 0
      %229 = vmatmul.mubr.bf16.gmra.mxu0 %v194
      %v230 = vpop.f32.mrf.mxu0
      %v231 = vadd.f32 %v178, %v230
      %v232 = vpop.f32.mrf.mxu0
      %v233 = vpop.f32.mrf.mxu0
      %v234 = vpop.f32.mrf.mxu0
      %235 = vdwg.mxu0
      %v236 = vpack.c.bf16 %v231, %v231
      %vm237 = vcmask 781312
      %238 = vst.msk [vmem:[%s165] sm:$0xf] %vm237, %v236
      %p239 = scmp.lt.s32.totalorder %s14, 1
      %s240 = scalar_select %p239, %s14, 1
      %s241 = smul.addr %s240, 4
      %s242 = scalar_lea.vmem %s3, %s241
      // Predicated region
      $region33: #{transformer_forward.9} parent=31 // pred_check
        %p243 = pneg %p100
      $region34: #{transformer_forward.9} parent=31 // pred_check_branch
        %245 = sbr.rel (%p243) target = $region36
      $region35: #{transformer_forward.9} parent=31 // pred_region
        _
      $region36: #{transformer_forward.9} parent=31 // pred_fallthru
        _
    $region32: #{transformer_forward.9} parent=5 // pred_fallthru
      _
    %p246 = scmp.le.s32.totalorder 2, %s9
    // Predicated region
    $region37: #{transformer_forward.9} parent=5 // pred_check
      %p247 = pneg %p246
    $region38: #{transformer_forward.9} parent=5 // pred_check_branch
      %249 = sbr.rel (%p247) target = $region40
    $region39: #{transformer_forward.9} parent=5 // pred_region
      %s250 = ssub.s32 %s9, 2
      // Predicated region
      $region41: #{transformer_forward.9} parent=39 // pred_check
        %p251 = pneg %p106
      $region42: #{transformer_forward.9} parent=39 // pred_check_branch
        %253 = sbr.rel (%p251) target = $region44
      $region43: #{transformer_forward.9} parent=39 // pred_region
        %p254 = scmp.lt.s32.totalorder %s15, 1
        %s255 = scalar_select %p254, %s15, 1
        %s256 = smul.addr %s255, 4
        %s257 = scalar_lea.vmem %s3, %s256
      $region44: #{transformer_forward.9} parent=39 // pred_fallthru
        _
    $region40: #{transformer_forward.9} parent=5 // pred_fallthru
      _
  $region6: #{transformer_forward.9} parent=0 // loop_footer
    %s13 = sadd.s32 1, %s9
  $region7: #{transformer_forward.9} parent=0 // loop_footer_branch
    %8 = sbr.rel target = $region3
  $region8: #{transformer_forward.9} parent=0 // loop_exit
    _

// kernel: transformer_forward.11
$region0: #{transformer_forward.11}
  #allocation0 [shape = 'u32[]', space=smem, size = 0x4, offset = 0x4, fixed_abs, tag = 'smem constant byte address 0x4 - core index']
  #allocation1 [shape = 'u32[144,128]{1,0:T(1,128)}', space=vmem, size = 0x12000, scoped, tag = 'internal scratch']
  %s0 = inlined_call_operand.vmem [shape: bf16[16,32], index: 0, kind: input, shape index: {}]
  %s1 = inlined_call_operand.vmem [shape: f32[16,32], index: 1, kind: input, shape index: {}]
  %s2 = inlined_call_operand.vmem [shape: bf16[32,32], index: 2, kind: input, shape index: {}]
  %s3 = inlined_call_operand.vmem [shape: f32[1,32], index: 3, kind: input, shape index: {}]
  %s4 = inlined_call_operand.vmem [shape: f32[1,32], index: 4, kind: input, shape index: {}]
  %s5 = inlined_call_operand.vmem [shape: f32[1,32], index: 5, kind: input, shape index: {}]
  %s6 = inlined_call_operand.vmem [shape: bf16[32,32], index: 6, kind: input, shape index: {}]
  %s7 = inlined_call_operand.vmem [shape: f32[1,32], index: 7, kind: input, shape index: {}]
  %s8 = inlined_call_operand.vmem [shape: bf16[32,32], index: 8, kind: input, shape index: {}]
  %s9 = inlined_call_operand.vmem [shape: f32[1,32], index: 9, kind: input, shape index: {}]
  %s10 = inlined_call_operand.vmem [shape: f32[1,32], index: 10, kind: input, shape index: {}]
  %s11 = inlined_call_operand.vmem [shape: f32[1,32], index: 11, kind: input, shape index: {}]
  %s12 = inlined_call_operand.vmem [shape: f32[16,32], index: 12, kind: output, shape index: {}]
  %s13 = sld [smem:[#allocation0]]
  $region81: #{transformer_forward.11} parent=0
    _
  %s15 = ssub.s32 1, %s13
  %s16 = scalar_select 0, %s15, %s13
  loop: start=0, step=1, limit=4
  $region2: #{transformer_forward.11} parent=0 // loop_pre_header
    _
  $region3: #{transformer_forward.11} parent=0 // loop_header
    %s18 = sphi 0, %s22
    %p19 = scmp.ge.s32.totalorder %s18, 4
    %s28 = sphi 0, %s30
    %s31 = sphi 0, %s28
    %s32 = sphi 0, %s31
    %s48 = sphi 0, %s32
    %s54 = sphi 0, %s56
    %s57 = sphi 0, %s54
    %s58 = sphi 0, %s57
    %s74 = sphi 0, %s58
    %s78 = sphi 0, %s78
    %s80 = sphi 0, %s78
    %s81 = sphi 0, %s80
    %s95 = sphi 0, %s81
    %s99 = sphi 0, %s99
    %s101 = sphi 0, %s99
    %s102 = sphi 0, %s101
    %s116 = sphi 0, %s102
    %s120 = sphi 0, %s120
    %s122 = sphi 0, %s120
    %s123 = sphi 0, %s122
    %s137 = sphi 0, %s123
    %s141 = sphi 0, %s141
    %s143 = sphi 0, %s141
    %s144 = sphi 0, %s143
    %s158 = sphi 0, %s144
    %s162 = sphi 0, %s162
    %s164 = sphi 0, %s162
    %s165 = sphi 0, %s164
    %s179 = sphi 0, %s165
    %s183 = sphi 0, %s183
    %s185 = sphi 0, %s183
    %s186 = sphi 0, %s185
    %s200 = sphi 0, %s186
    %s204 = sphi 0, %s204
    %s206 = sphi 0, %s204
    %s207 = sphi 0, %s206
    %s221 = sphi 0, %s207
    %s225 = sphi 0, %s225
    %s227 = sphi 0, %s225
    %s228 = sphi 0, %s227
    %s242 = sphi 0, %s228
    %s246 = sphi 0, %s246
    %s248 = sphi 0, %s246
    %s249 = sphi 0, %s248
    %s263 = sphi 0, %s249
    %s267 = sphi 0, %s267
    %s269 = sphi 0, %s267
    %s270 = sphi 0, %s269
    %s284 = sphi 0, %s270
    %s290 = sphi 0, %s292
    %s293 = sphi 0, %s290
    %s294 = sphi 0, %s293
    %s310 = sphi 0, %s294
  $region4: #{transformer_forward.11} parent=0 // loop_header_branch
    %21 = sbr.rel (%p19) target = $region8
  $region5: #{transformer_forward.11} parent=0 // loop_body
    %s23 = ssub.s32 %s18, 1
    %s24 = ssub.s32 %s18, 2
    %s25 = sadd.s32 %s18, 1
    %s26 = ssub.s32 %s18, %s25
    %p27 = scmp.eq.s32.totalorder %s26, 0
    %s29 = sadd.s32 %s28, 1
    %s30 = scalar_select %p27, %s28, %s29
    %p33 = pneg %p27
    %p34 = scmp.eq.s32.totalorder %s18, 1
    %p35 = por %p33, %p34
    %p36 = scmp.ne.s32.totalorder %s28, %s31
    %p37 = scmp.eq.s32.totalorder %s18, 0
    %p38 = por %p36, %p37
    %p39 = scmp.ne.s32.totalorder %s28, %s31
    %p40 = scmp.eq.s32.totalorder %s23, 1
    %p41 = por %p39, %p40
    %p42 = scmp.ne.s32.totalorder %s31, %s32
    %p43 = scmp.eq.s32.totalorder %s23, 0
    %p44 = por %p42, %p43
    %p45 = scmp.ne.s32.totalorder %s31, %s32
    %p46 = scmp.eq.s32.totalorder %s24, 1
    %p47 = por %p45, %p46
    %p49 = scmp.ne.s32.totalorder %s32, %s48
    %p50 = scmp.eq.s32.totalorder %s24, 0
    %p51 = por %p49, %p50
    %s52 = ssub.s32 %s18, %s25
    %p53 = scmp.eq.s32.totalorder %s52, 0
    %s55 = sadd.s32 %s54, 1
    %s56 = scalar_select %p53, %s54, %s55
    %p59 = pneg %p53
    %p60 = scmp.eq.s32.totalorder %s18, 1
    %p61 = por %p59, %p60
    %p62 = scmp.ne.s32.totalorder %s54, %s57
    %p63 = scmp.eq.s32.totalorder %s18, 0
    %p64 = por %p62, %p63
    %p65 = scmp.ne.s32.totalorder %s54, %s57
    %p66 = scmp.eq.s32.totalorder %s23, 1
    %p67 = por %p65, %p66
    %p68 = scmp.ne.s32.totalorder %s57, %s58
    %p69 = scmp.eq.s32.totalorder %s23, 0
    %p70 = por %p68, %p69
    %p71 = scmp.ne.s32.totalorder %s57, %s58
    %p72 = scmp.eq.s32.totalorder %s24, 1
    %p73 = por %p71, %p72
    %p75 = scmp.ne.s32.totalorder %s58, %s74
    %p76 = scmp.eq.s32.totalorder %s24, 0
    %p77 = por %p75, %p76
    %s79 = sadd.s32 %s78, 1
    %p82 = scmp.eq.s32.totalorder %s18, 1
    %p83 = scmp.ne.s32.totalorder %s78, %s80
    %p84 = scmp.eq.s32.totalorder %s18, 0
    %p85 = por %p83, %p84
    %p86 = scmp.ne.s32.totalorder %s78, %s80
    %p87 = scmp.eq.s32.totalorder %s23, 1
    %p88 = por %p86, %p87
    %p89 = scmp.ne.s32.totalorder %s80, %s81
    %p90 = scmp.eq.s32.totalorder %s23, 0
    %p91 = por %p89, %p90
    %p92 = scmp.ne.s32.totalorder %s80, %s81
    %p93 = scmp.eq.s32.totalorder %s24, 1
    %p94 = por %p92, %p93
    %p96 = scmp.ne.s32.totalorder %s81, %s95
    %p97 = scmp.eq.s32.totalorder %s24, 0
    %p98 = por %p96, %p97
    %s100 = sadd.s32 %s99, 1
    %p103 = scmp.eq.s32.totalorder %s18, 1
    %p104 = scmp.ne.s32.totalorder %s99, %s101
    %p105 = scmp.eq.s32.totalorder %s18, 0
    %p106 = por %p104, %p105
    %p107 = scmp.ne.s32.totalorder %s99, %s101
    %p108 = scmp.eq.s32.totalorder %s23, 1
    %p109 = por %p107, %p108
    %p110 = scmp.ne.s32.totalorder %s101, %s102
    %p111 = scmp.eq.s32.totalorder %s23, 0
    %p112 = por %p110, %p111
    %p113 = scmp.ne.s32.totalorder %s101, %s102
    %p114 = scmp.eq.s32.totalorder %s24, 1
    %p115 = por %p113, %p114
    %p117 = scmp.ne.s32.totalorder %s102, %s116
    %p118 = scmp.eq.s32.totalorder %s24, 0
    %p119 = por %p117, %p118
    %s121 = sadd.s32 %s120, 1
    %p124 = scmp.eq.s32.totalorder %s18, 1
    %p125 = scmp.ne.s32.totalorder %s120, %s122
    %p126 = scmp.eq.s32.totalorder %s18, 0
    %p127 = por %p125, %p126
    %p128 = scmp.ne.s32.totalorder %s120, %s122
    %p129 = scmp.eq.s32.totalorder %s23, 1
    %p130 = por %p128, %p129
    %p131 = scmp.ne.s32.totalorder %s122, %s123
    %p132 = scmp.eq.s32.totalorder %s23, 0
    %p133 = por %p131, %p132
    %p134 = scmp.ne.s32.totalorder %s122, %s123
    %p135 = scmp.eq.s32.totalorder %s24, 1
    %p136 = por %p134, %p135
    %p138 = scmp.ne.s32.totalorder %s123, %s137
    %p139 = scmp.eq.s32.totalorder %s24, 0
    %p140 = por %p138, %p139
    %s142 = sadd.s32 %s141, 1
    %p145 = scmp.eq.s32.totalorder %s18, 1
    %p146 = scmp.ne.s32.totalorder %s141, %s143
    %p147 = scmp.eq.s32.totalorder %s18, 0
    %p148 = por %p146, %p147
    %p149 = scmp.ne.s32.totalorder %s141, %s143
    %p150 = scmp.eq.s32.totalorder %s23, 1
    %p151 = por %p149, %p150
    %p152 = scmp.ne.s32.totalorder %s143, %s144
    %p153 = scmp.eq.s32.totalorder %s23, 0
    %p154 = por %p152, %p153
    %p155 = scmp.ne.s32.totalorder %s143, %s144
    %p156 = scmp.eq.s32.totalorder %s24, 1
    %p157 = por %p155, %p156
    %p159 = scmp.ne.s32.totalorder %s144, %s158
    %p160 = scmp.eq.s32.totalorder %s24, 0
    %p161 = por %p159, %p160
    %s163 = sadd.s32 %s162, 1
    %p166 = scmp.eq.s32.totalorder %s18, 1
    %p167 = scmp.ne.s32.totalorder %s162, %s164
    %p168 = scmp.eq.s32.totalorder %s18, 0
    %p169 = por %p167, %p168
    %p170 = scmp.ne.s32.totalorder %s162, %s164
    %p171 = scmp.eq.s32.totalorder %s23, 1
    %p172 = por %p170, %p171
    %p173 = scmp.ne.s32.totalorder %s164, %s165
    %p174 = scmp.eq.s32.totalorder %s23, 0
    %p175 = por %p173, %p174
    %p176 = scmp.ne.s32.totalorder %s164, %s165
    %p177 = scmp.eq.s32.totalorder %s24, 1
    %p178 = por %p176, %p177
    %p180 = scmp.ne.s32.totalorder %s165, %s179
    %p181 = scmp.eq.s32.totalorder %s24, 0
    %p182 = por %p180, %p181
    %s184 = sadd.s32 %s183, 1
    %p187 = scmp.eq.s32.totalorder %s18, 1
    %p188 = scmp.ne.s32.totalorder %s183, %s185
    %p189 = scmp.eq.s32.totalorder %s18, 0
    %p190 = por %p188, %p189
    %p191 = scmp.ne.s32.totalorder %s183, %s185
    %p192 = scmp.eq.s32.totalorder %s23, 1
    %p193 = por %p191, %p192
    %p194 = scmp.ne.s32.totalorder %s185, %s186
    %p195 = scmp.eq.s32.totalorder %s23, 0
    %p196 = por %p194, %p195
    %p197 = scmp.ne.s32.totalorder %s185, %s186
    %p198 = scmp.eq.s32.totalorder %s24, 1
    %p199 = por %p197, %p198
    %p201 = scmp.ne.s32.totalorder %s186, %s200
    %p202 = scmp.eq.s32.totalorder %s24, 0
    %p203 = por %p201, %p202
    %s205 = sadd.s32 %s204, 1
    %p208 = scmp.eq.s32.totalorder %s18, 1
    %p209 = scmp.ne.s32.totalorder %s204, %s206
    %p210 = scmp.eq.s32.totalorder %s18, 0
    %p211 = por %p209, %p210
    %p212 = scmp.ne.s32.totalorder %s204, %s206
    %p213 = scmp.eq.s32.totalorder %s23, 1
    %p214 = por %p212, %p213
    %p215 = scmp.ne.s32.totalorder %s206, %s207
    %p216 = scmp.eq.s32.totalorder %s23, 0
    %p217 = por %p215, %p216
    %p218 = scmp.ne.s32.totalorder %s206, %s207
    %p219 = scmp.eq.s32.totalorder %s24, 1
    %p220 = por %p218, %p219
    %p222 = scmp.ne.s32.totalorder %s207, %s221
    %p223 = scmp.eq.s32.totalorder %s24, 0
    %p224 = por %p222, %p223
    %s226 = sadd.s32 %s225, 1
    %p229 = scmp.eq.s32.totalorder %s18, 1
    %p230 = scmp.ne.s32.totalorder %s225, %s227
    %p231 = scmp.eq.s32.totalorder %s18, 0
    %p232 = por %p230, %p231
    %p233 = scmp.ne.s32.totalorder %s225, %s227
    %p234 = scmp.eq.s32.totalorder %s23, 1
    %p235 = por %p233, %p234
    %p236 = scmp.ne.s32.totalorder %s227, %s228
    %p237 = scmp.eq.s32.totalorder %s23, 0
    %p238 = por %p236, %p237
    %p239 = scmp.ne.s32.totalorder %s227, %s228
    %p240 = scmp.eq.s32.totalorder %s24, 1
    %p241 = por %p239, %p240
    %p243 = scmp.ne.s32.totalorder %s228, %s242
    %p244 = scmp.eq.s32.totalorder %s24, 0
    %p245 = por %p243, %p244
    %s247 = sadd.s32 %s246, 1
    %p250 = scmp.eq.s32.totalorder %s18, 1
    %p251 = scmp.ne.s32.totalorder %s246, %s248
    %p252 = scmp.eq.s32.totalorder %s18, 0
    %p253 = por %p251, %p252
    %p254 = scmp.ne.s32.totalorder %s246, %s248
    %p255 = scmp.eq.s32.totalorder %s23, 1
    %p256 = por %p254, %p255
    %p257 = scmp.ne.s32.totalorder %s248, %s249
    %p258 = scmp.eq.s32.totalorder %s23, 0
    %p259 = por %p257, %p258
    %p260 = scmp.ne.s32.totalorder %s248, %s249
    %p261 = scmp.eq.s32.totalorder %s24, 1
    %p262 = por %p260, %p261
    %p264 = scmp.ne.s32.totalorder %s249, %s263
    %p265 = scmp.eq.s32.totalorder %s24, 0
    %p266 = por %p264, %p265
    %s268 = sadd.s32 %s267, 1
    %p271 = scmp.eq.s32.totalorder %s18, 1
    %p272 = scmp.ne.s32.totalorder %s267, %s269
    %p273 = scmp.eq.s32.totalorder %s18, 0
    %p274 = por %p272, %p273
    %p275 = scmp.ne.s32.totalorder %s267, %s269
    %p276 = scmp.eq.s32.totalorder %s23, 1
    %p277 = por %p275, %p276
    %p278 = scmp.ne.s32.totalorder %s269, %s270
    %p279 = scmp.eq.s32.totalorder %s23, 0
    %p280 = por %p278, %p279
    %p281 = scmp.ne.s32.totalorder %s269, %s270
    %p282 = scmp.eq.s32.totalorder %s24, 1
    %p283 = por %p281, %p282
    %p285 = scmp.ne.s32.totalorder %s270, %s284
    %p286 = scmp.eq.s32.totalorder %s24, 0
    %p287 = por %p285, %p286
    %s288 = ssub.s32 %s18, %s25
    %p289 = scmp.eq.s32.totalorder %s288, 0
    %s291 = sadd.s32 %s290, 1
    %s292 = scalar_select %p289, %s290, %s291
    %p295 = pneg %p289
    %p296 = scmp.eq.s32.totalorder %s18, 1
    %p297 = por %p295, %p296
    %p298 = scmp.ne.s32.totalorder %s290, %s293
    %p299 = scmp.eq.s32.totalorder %s18, 0
    %p300 = por %p298, %p299
    %p301 = scmp.ne.s32.totalorder %s290, %s293
    %p302 = scmp.eq.s32.totalorder %s23, 1
    %p303 = por %p301, %p302
    %p304 = scmp.ne.s32.totalorder %s293, %s294
    %p305 = scmp.eq.s32.totalorder %s23, 0
    %p306 = por %p304, %p305
    %p307 = scmp.ne.s32.totalorder %s293, %s294
    %p308 = scmp.eq.s32.totalorder %s24, 1
    %p309 = por %p307, %p308
    %p311 = scmp.ne.s32.totalorder %s294, %s310
    %p312 = scmp.eq.s32.totalorder %s24, 0
    %p313 = por %p311, %p312
    %p314 = scmp.le.s32.totalorder 1, %s18
    %p315 = scmp.lt.s32.totalorder %s18, 3
    %p316 = pnand %p314, %p315
    %p317 = pneg %p316
    // Predicated region
    $region9: #{transformer_forward.11} parent=5 // pred_check
      _
    $region10: #{transformer_forward.11} parent=5 // pred_check_branch
      %319 = sbr.rel (%p316) target = $region12
    $region11: #{transformer_forward.11} parent=5 // pred_region
      %s320 = ssub.s32 %s18, 1
      // Predicated region
      $region13: #{transformer_forward.11} parent=11 // pred_check
        %p321 = pneg %p91
      $region14: #{transformer_forward.11} parent=11 // pred_check_branch
        %323 = sbr.rel (%p321) target = $region16
      $region15: #{transformer_forward.11} parent=11 // pred_region
        _
      $region16: #{transformer_forward.11} parent=11 // pred_fallthru
        _
      // Predicated region
      $region17: #{transformer_forward.11} parent=11 // pred_check
        %p324 = pneg %p112
      $region18: #{transformer_forward.11} parent=11 // pred_check_branch
        %326 = sbr.rel (%p324) target = $region20
      $region19: #{transformer_forward.11} parent=11 // pred_region
        _
      $region20: #{transformer_forward.11} parent=11 // pred_fallthru
        _
      // Predicated region
      $region21: #{transformer_forward.11} parent=11 // pred_check
        %p327 = pneg %p133
      $region22: #{transformer_forward.11} parent=11 // pred_check_branch
        %329 = sbr.rel (%p327) target = $region24
      $region23: #{transformer_forward.11} parent=11 // pred_region
        _
      $region24: #{transformer_forward.11} parent=11 // pred_fallthru
        _
      // Predicated region
      $region25: #{transformer_forward.11} parent=11 // pred_check
        %p330 = pneg %p154
      $region26: #{transformer_forward.11} parent=11 // pred_check_branch
        %332 = sbr.rel (%p330) target = $region28
      $region27: #{transformer_forward.11} parent=11 // pred_region
        _
      $region28: #{transformer_forward.11} parent=11 // pred_fallthru
        _
      // Predicated region
      $region29: #{transformer_forward.11} parent=11 // pred_check
        %p333 = pneg %p175
      $region30: #{transformer_forward.11} parent=11 // pred_check_branch
        %335 = sbr.rel (%p333) target = $region32
      $region31: #{transformer_forward.11} parent=11 // pred_region
        _
      $region32: #{transformer_forward.11} parent=11 // pred_fallthru
        _
      // Predicated region
      $region33: #{transformer_forward.11} parent=11 // pred_check
        %p336 = pneg %p196
      $region34: #{transformer_forward.11} parent=11 // pred_check_branch
        %338 = sbr.rel (%p336) target = $region36
      $region35: #{transformer_forward.11} parent=11 // pred_region
        _
      $region36: #{transformer_forward.11} parent=11 // pred_fallthru
        _
      // Predicated region
      $region37: #{transformer_forward.11} parent=11 // pred_check
        %p339 = pneg %p217
      $region38: #{transformer_forward.11} parent=11 // pred_check_branch
        %341 = sbr.rel (%p339) target = $region40
      $region39: #{transformer_forward.11} parent=11 // pred_region
        _
      $region40: #{transformer_forward.11} parent=11 // pred_fallthru
        _
      // Predicated region
      $region41: #{transformer_forward.11} parent=11 // pred_check
        %p342 = pneg %p238
      $region42: #{transformer_forward.11} parent=11 // pred_check_branch
        %344 = sbr.rel (%p342) target = $region44
      $region43: #{transformer_forward.11} parent=11 // pred_region
        _
      $region44: #{transformer_forward.11} parent=11 // pred_fallthru
        _
      // Predicated region
      $region45: #{transformer_forward.11} parent=11 // pred_check
        %p345 = pneg %p259
      $region46: #{transformer_forward.11} parent=11 // pred_check_branch
        %347 = sbr.rel (%p345) target = $region48
      $region47: #{transformer_forward.11} parent=11 // pred_region
        _
      $region48: #{transformer_forward.11} parent=11 // pred_fallthru
        _
      // Predicated region
      $region49: #{transformer_forward.11} parent=11 // pred_check
        %p348 = pneg %p280
      $region50: #{transformer_forward.11} parent=11 // pred_check_branch
        %350 = sbr.rel (%p348) target = $region52
      $region51: #{transformer_forward.11} parent=11 // pred_region
        _
      $region52: #{transformer_forward.11} parent=11 // pred_fallthru
        _
    $region12: #{transformer_forward.11} parent=5 // pred_fallthru
      _
    %p351 = scmp.lt.s32.totalorder %s18, 2
    // Predicated region
    $region53: #{transformer_forward.11} parent=5 // pred_check
      %p352 = pneg %p351
    $region54: #{transformer_forward.11} parent=5 // pred_check_branch
      %354 = sbr.rel (%p352) target = $region56
    $region55: #{transformer_forward.11} parent=5 // pred_region
      // Predicated region
      $region57: #{transformer_forward.11} parent=55 // pred_check
        %p355 = pneg %p38
      $region58: #{transformer_forward.11} parent=55 // pred_check_branch
        %357 = sbr.rel (%p355) target = $region60
      $region59: #{transformer_forward.11} parent=55 // pred_region
        %p358 = scmp.lt.s32.totalorder %s18, 1
        %s359 = scalar_select %p358, %s18, 1
        %s360 = smul.addr %s359, 4
        %s361 = scalar_lea.vmem %s0, %s360
      $region60: #{transformer_forward.11} parent=55 // pred_fallthru
        _
      // Predicated region
      $region61: #{transformer_forward.11} parent=55 // pred_check
        %p362 = pneg %p64
      $region62: #{transformer_forward.11} parent=55 // pred_check_branch
        %364 = sbr.rel (%p362) target = $region64
      $region63: #{transformer_forward.11} parent=55 // pred_region
        %p365 = scmp.lt.s32.totalorder %s18, 1
        %s366 = scalar_select %p365, %s18, 1
        %s367 = smul.addr %s366, 8
        %s368 = scalar_lea.vmem %s1, %s367
      $region64: #{transformer_forward.11} parent=55 // pred_fallthru
        _
    $region56: #{transformer_forward.11} parent=5 // pred_fallthru
      _
    %p369 = scmp.le.s32.totalorder 1, %s18
    %p370 = scmp.lt.s32.totalorder %s18, 3
    %p371 = pnand %p369, %p370
    %p372 = pneg %p371
    // Predicated region
    $region65: #{transformer_forward.11} parent=5 // pred_check
      _
    $region66: #{transformer_forward.11} parent=5 // pred_check_branch
      %374 = sbr.rel (%p371) target = $region68
    $region67: #{transformer_forward.11} parent=5 // pred_region
      %s375 = ssub.s32 %s18, 1
      %p376 = scmp.lt.s32.totalorder %s23, 1
      %s377 = scalar_select %p376, %s23, 1
      %s378 = smul.addr %s377, 4
      %s379 = scalar_lea.vmem %s0, %s378
      %p380 = pneg %p44
      %p381 = pneg %p41
      %p382 = scmp.lt.s32.totalorder %s23, 1
      %s383 = scalar_select %p382, %s23, 1
      %s384 = smul.addr %s383, 8
      %s385 = scalar_lea.vmem %s1, %s384
      %p386 = pneg %p70
      %p387 = pneg %p67
      %p388 = pneg %p91
      %p389 = pneg %p88
      %p390 = pneg %p112
      %p391 = pneg %p109
      %p392 = pneg %p133
      %p393 = pneg %p130
      %p394 = pneg %p154
      %p395 = pneg %p151
      %p396 = pneg %p175
      %p397 = pneg %p172
      %p398 = pneg %p196
      %p399 = pneg %p193
      %p400 = pneg %p217
      %p401 = pneg %p214
      %p402 = pneg %p238
      %p403 = pneg %p235
      %p404 = pneg %p259
      %p405 = pneg %p256
      %p406 = pneg %p280
      %p407 = pneg %p277
      %p408 = pneg %p306
      %p409 = pneg %p303
      %p410 = scmp.lt.s32.totalorder %s23, 1
      %s411 = scalar_select %p410, %s23, 1
      %s412 = smul.addr %s411, 8
      %s413 = scalar_lea.vmem %s12, %s412
      %p414 = scmp.lt.s32.totalorder %s23, 1
      %s415 = scalar_select %p414, %s23, 1
      %s416 = smul.addr %s415, 4
      %s417 = scalar_lea.vmem %s0, %s416
      %p418 = scmp.lt.s32.totalorder %s23, 1
      %s419 = scalar_select %p418, %s23, 1
      %s420 = smul.addr %s419, 8
      %s421 = scalar_lea.vmem %s1, %s420
      %p422 = scmp.lt.s32.totalorder %s23, 1
      %s423 = scalar_select %p422, %s23, 1
      %s424 = smul.addr %s423, 8
      %s425 = scalar_lea.vmem %s12, %s424
      %v427 = vld [vmem:[%s417] sm:$0xf]
      %v428 = vld [vmem:[%s2] sm:$0xf]
      %v429 = vld [vmem:[%s2 + $0x4] sm:$0xf]
      %v430 = vld [vmem:[%s2 + $0x8] sm:$0xf]
      %v431 = vld [vmem:[%s2 + $0xc] sm:$0xf]
      %v432 = vld [vmem:[%s3] sm:$0x1]
      %v434 = vlaneseq
      %v435 = vshrl.u32 %v434, 7
      %v436 = vsub.s32 0, %v435
      %v437 = vrot.slane %v432, %v436
      %v443 = vunpack.c.l.b16 %v428
      %v444 = vunpack.c.l.b16 %v429
      %v445 = vunpack.c.l.b16 %v430
      %v446 = vunpack.c.l.b16 %v431
      %v447 = vpack.c.b16 %v444, %v443
      %v448 = vpack.c.b16 %v446, %v445
      %vm451 = vcmask 261120
      %v453 = vsel %vm451, %v427, 0
      %455 = vmatprep.subr.bf16.mxu0 0
      %456 = vmatpush1.bf16.msra.mxu0 0
      %457 = vmatprep.subr.bf16.mxu0 0
      %458 = vmatpush1.bf16.msra.mxu0 0
      %459 = vmatprep.subr.bf16.mxu0 0
      %460 = vmatpush1.bf16.msra.mxu0 0
      %461 = vmatprep.subr.bf16.mxu0 0
      %462 = vmatpush1.bf16.msra.mxu0 0
      %463 = vmatprep.subr.bf16.mxu0 0
      %464 = vmatpush1.bf16.msra.mxu0 0
      %465 = vmatprep.subr.bf16.mxu0 0
      %466 = vmatpush1.bf16.msra.mxu0 0
      %467 = vmatprep.subr.bf16.mxu0 0
      %468 = vmatpush1.bf16.msra.mxu0 %v448
      %469 = vmatprep.subr.bf16.mxu0 0
      %470 = vmatpush1.bf16.msra.mxu0 %v447
      %471 = vmatprep.subr.bf16.mxu0 0
      %472 = vmatpush2.bf16.msra.mxu0 0
      %473 = vmatprep.subr.bf16.mxu0 0
      %474 = vmatpush2.bf16.msra.mxu0 0
      %475 = vmatprep.subr.bf16.mxu0 0
      %476 = vmatpush2.bf16.msra.mxu0 0
      %477 = vmatprep.subr.bf16.mxu0 0
      %478 = vmatpush2.bf16.msra.mxu0 0
      %479 = vmatprep.subr.bf16.mxu0 0
      %480 = vmatpush2.bf16.msra.mxu0 0
      %481 = vmatprep.subr.bf16.mxu0 0
      %482 = vmatpush2.bf16.msra.mxu0 0
      %483 = vmatprep.subr.bf16.mxu0 0
      %484 = vmatpush2.bf16.msra.mxu0 0
      %485 = vmatprep.subr.bf16.mxu0 0
      %486 = vmatpush2.bf16.msra.mxu0 0
      %487 = vmatprep.mubr.bf16.mxu0 0
      %488 = vmatmul.mubr.bf16.gmra.mxu0 %v453
      %v489 = vpop.f32.mrf.mxu0
      %v490 = vadd.f32 %v437, %v489
      %v491 = vpop.f32.mrf.mxu0
      %v492 = vpop.f32.mrf.mxu0
      %v493 = vpop.f32.mrf.mxu0
      %494 = vdwg.mxu0
      %v495 = vld [vmem:[%s421] sm:$0xff]
      %v496 = vadd.f32 %v495, %v490
      %v497 = vsel %vm451, %v496, 0.0
      %498 = vadd.xlane.f32.xlu0 %v497
      %v499 = vpop.xlane.xlu0 %498
      %v500 = vrcp.pop 32.0
      %v501 = vmul.f32 %v499, %v500
      %v502 = vmul.f32 %v496, %v496
      %v503 = vsel %vm451, %v502, 0.0
      %504 = vadd.xlane.f32.xlu0 %v503
      %v505 = vpop.xlane.xlu0 %504
      %v506 = vmul.f32 %v505, %v500
      %v507 = vmul.f32 %v501, %v501
      %v508 = vsub.f32 %v506, %v507
      %v509 = vsub.f32 %v496, %v501
      %v510 = vadd.f32 %v508, 1e-05
      %v511 = vrsqrt.pop %v510
      %v512 = vmul.f32 %v509, %v511
      %v513 = vld [vmem:[%s4] sm:$0x1]
      %v515 = vlaneseq
      %v516 = vshrl.u32 %v515, 7
      %v517 = vsub.s32 0, %v516
      %v518 = vrot.slane %v513, %v517
      %v520 = vmul.f32 %v512, %v518
      %v521 = vld [vmem:[%s5] sm:$0x1]
      %v523 = vlaneseq
      %v524 = vshrl.u32 %v523, 7
      %v525 = vsub.s32 0, %v524
      %v526 = vrot.slane %v521, %v525
      %v528 = vadd.f32 %v520, %v526
      %v529 = vpack.c.bf16 %v528, %v528
      %v530 = vld [vmem:[%s6] sm:$0xf]
      %v531 = vld [vmem:[%s6 + $0x4] sm:$0xf]
      %v532 = vld [vmem:[%s6 + $0x8] sm:$0xf]
      %v533 = vld [vmem:[%s6 + $0xc] sm:$0xf]
      %v534 = vld [vmem:[%s7] sm:$0x1]
      %v536 = vlaneseq
      %v537 = vshrl.u32 %v536, 7
      %v538 = vsub.s32 0, %v537
      %v539 = vrot.slane %v534, %v538
      %v545 = vunpack.c.l.b16 %v530
      %v546 = vunpack.c.l.b16 %v531
      %v547 = vunpack.c.l.b16 %v532
      %v548 = vunpack.c.l.b16 %v533
      %v549 = vpack.c.b16 %v546, %v545
      %v550 = vpack.c.b16 %v548, %v547
      %v554 = vsel %vm451, %v529, 0
      %556 = vmatprep.subr.bf16.mxu0 0
      %557 = vmatpush1.bf16.msra.mxu0 0
      %558 = vmatprep.subr.bf16.mxu0 0
      %559 = vmatpush1.bf16.msra.mxu0 0
      %560 = vmatprep.subr.bf16.mxu0 0
      %561 = vmatpush1.bf16.msra.mxu0 0
      %562 = vmatprep.subr.bf16.mxu0 0
      %563 = vmatpush1.bf16.msra.mxu0 0
      %564 = vmatprep.subr.bf16.mxu0 0
      %565 = vmatpush1.bf16.msra.mxu0 0
      %566 = vmatprep.subr.bf16.mxu0 0
      %567 = vmatpush1.bf16.msra.mxu0 0
      %568 = vmatprep.subr.bf16.mxu0 0
      %569 = vmatpush1.bf16.msra.mxu0 %v550
      %570 = vmatprep.subr.bf16.mxu0 0
      %571 = vmatpush1.bf16.msra.mxu0 %v549
      %572 = vmatprep.subr.bf16.mxu0 0
      %573 = vmatpush2.bf16.msra.mxu0 0
      %574 = vmatprep.subr.bf16.mxu0 0
      %575 = vmatpush2.bf16.msra.mxu0 0
      %576 = vmatprep.subr.bf16.mxu0 0
      %577 = vmatpush2.bf16.msra.mxu0 0
      %578 = vmatprep.subr.bf16.mxu0 0
      %579 = vmatpush2.bf16.msra.mxu0 0
      %580 = vmatprep.subr.bf16.mxu0 0
      %581 = vmatpush2.bf16.msra.mxu0 0
      %582 = vmatprep.subr.bf16.mxu0 0
      %583 = vmatpush2.bf16.msra.mxu0 0
      %584 = vmatprep.subr.bf16.mxu0 0
      %585 = vmatpush2.bf16.msra.mxu0 0
      %586 = vmatprep.subr.bf16.mxu0 0
      %587 = vmatpush2.bf16.msra.mxu0 0
      %588 = vmatprep.mubr.bf16.mxu0 0
      %589 = vmatmul.mubr.bf16.gmra.mxu0 %v554
      %v590 = vpop.f32.mrf.mxu0
      %v591 = vadd.f32 %v539, %v590
      %v592 = vpop.f32.mrf.mxu0
      %v593 = vpop.f32.mrf.mxu0
      %v594 = vpop.f32.mrf.mxu0
      %595 = vdwg.mxu0
      %v596 = vmax.f32 %v591, 0.0
      %v597 = vpack.c.bf16 %v596, %v596
      %v598 = vld [vmem:[%s8] sm:$0xf]
      %v599 = vld [vmem:[%s8 + $0x4] sm:$0xf]
      %v600 = vld [vmem:[%s8 + $0x8] sm:$0xf]
      %v601 = vld [vmem:[%s8 + $0xc] sm:$0xf]
      %v602 = vld [vmem:[%s9] sm:$0x1]
      %v604 = vlaneseq
      %v605 = vshrl.u32 %v604, 7
      %v606 = vsub.s32 0, %v605
      %v607 = vrot.slane %v602, %v606
      %v613 = vunpack.c.l.b16 %v598
      %v614 = vunpack.c.l.b16 %v599
      %v615 = vunpack.c.l.b16 %v600
      %v616 = vunpack.c.l.b16 %v601
      %v617 = vpack.c.b16 %v614, %v613
      %v618 = vpack.c.b16 %v616, %v615
      %v622 = vsel %vm451, %v597, 0
      %624 = vmatprep.subr.bf16.mxu0 0
      %625 = vmatpush1.bf16.msra.mxu0 0
      %626 = vmatprep.subr.bf16.mxu0 0
      %627 = vmatpush1.bf16.msra.mxu0 0
      %628 = vmatprep.subr.bf16.mxu0 0
      %629 = vmatpush1.bf16.msra.mxu0 0
      %630 = vmatprep.subr.bf16.mxu0 0
      %631 = vmatpush1.bf16.msra.mxu0 0
      %632 = vmatprep.subr.bf16.mxu0 0
      %633 = vmatpush1.bf16.msra.mxu0 0
      %634 = vmatprep.subr.bf16.mxu0 0
      %635 = vmatpush1.bf16.msra.mxu0 0
      %636 = vmatprep.subr.bf16.mxu0 0
      %637 = vmatpush1.bf16.msra.mxu0 %v618
      %638 = vmatprep.subr.bf16.mxu0 0
      %639 = vmatpush1.bf16.msra.mxu0 %v617
      %640 = vmatprep.subr.bf16.mxu0 0
      %641 = vmatpush2.bf16.msra.mxu0 0
      %642 = vmatprep.subr.bf16.mxu0 0
      %643 = vmatpush2.bf16.msra.mxu0 0
      %644 = vmatprep.subr.bf16.mxu0 0
      %645 = vmatpush2.bf16.msra.mxu0 0
      %646 = vmatprep.subr.bf16.mxu0 0
      %647 = vmatpush2.bf16.msra.mxu0 0
      %648 = vmatprep.subr.bf16.mxu0 0
      %649 = vmatpush2.bf16.msra.mxu0 0
      %650 = vmatprep.subr.bf16.mxu0 0
      %651 = vmatpush2.bf16.msra.mxu0 0
      %652 = vmatprep.subr.bf16.mxu0 0
      %653 = vmatpush2.bf16.msra.mxu0 0
      %654 = vmatprep.subr.bf16.mxu0 0
      %655 = vmatpush2.bf16.msra.mxu0 0
      %656 = vmatprep.mubr.bf16.mxu0 0
      %657 = vmatmul.mubr.bf16.gmra.mxu0 %v622
      %v658 = vpop.f32.mrf.mxu0
      %v659 = vadd.f32 %v607, %v658
      %v660 = vpop.f32.mrf.mxu0
      %v661 = vpop.f32.mrf.mxu0
      %v662 = vpop.f32.mrf.mxu0
      %663 = vdwg.mxu0
      %v664 = vadd.f32 %v528, %v659
      %v665 = vsel %vm451, %v664, 0.0
      %666 = vadd.xlane.f32.xlu0 %v665
      %v667 = vpop.xlane.xlu0 %666
      %v668 = vmul.f32 %v667, %v500
      %v669 = vmul.f32 %v664, %v664
      %v670 = vsel %vm451, %v669, 0.0
      %671 = vadd.xlane.f32.xlu0 %v670
      %v672 = vpop.xlane.xlu0 %671
      %v673 = vmul.f32 %v672, %v500
      %v674 = vmul.f32 %v668, %v668
      %v675 = vsub.f32 %v673, %v674
      %v676 = vsub.f32 %v664, %v668
      %v677 = vadd.f32 %v675, 1e-05
      %v678 = vrsqrt.pop %v677
      %v679 = vmul.f32 %v676, %v678
      %v680 = vld [vmem:[%s10] sm:$0x1]
      %v682 = vlaneseq
      %v683 = vshrl.u32 %v682, 7
      %v684 = vsub.s32 0, %v683
      %v685 = vrot.slane %v680, %v684
      %v687 = vmul.f32 %v679, %v685
      %v688 = vld [vmem:[%s11] sm:$0x1]
      %v690 = vlaneseq
      %v691 = vshrl.u32 %v690, 7
      %v692 = vsub.s32 0, %v691
      %v693 = vrot.slane %v688, %v692
      %v695 = vadd.f32 %v687, %v693
      %696 = vst.msk [vmem:[%s425] sm:$0xff] %vm451, %v695
      %p697 = scmp.lt.s32.totalorder %s23, 1
      %s698 = scalar_select %p697, %s23, 1
      %s699 = smul.addr %s698, 8
      %s700 = scalar_lea.vmem %s12, %s699
      // Predicated region
      $region69: #{transformer_forward.11} parent=67 // pred_check
        %p701 = pneg %p303
      $region70: #{transformer_forward.11} parent=67 // pred_check_branch
        %703 = sbr.rel (%p701) target = $region72
      $region71: #{transformer_forward.11} parent=67 // pred_region
        _
      $region72: #{transformer_forward.11} parent=67 // pred_fallthru
        _
    $region68: #{transformer_forward.11} parent=5 // pred_fallthru
      _
    %p704 = scmp.le.s32.totalorder 2, %s18
    // Predicated region
    $region73: #{transformer_forward.11} parent=5 // pred_check
      %p705 = pneg %p704
    $region74: #{transformer_forward.11} parent=5 // pred_check_branch
      %707 = sbr.rel (%p705) target = $region76
    $region75: #{transformer_forward.11} parent=5 // pred_region
      %s708 = ssub.s32 %s18, 2
      // Predicated region
      $region77: #{transformer_forward.11} parent=75 // pred_check
        %p709 = pneg %p309
      $region78: #{transformer_forward.11} parent=75 // pred_check_branch
        %711 = sbr.rel (%p709) target = $region80
      $region79: #{transformer_forward.11} parent=75 // pred_region
        %p712 = scmp.lt.s32.totalorder %s24, 1
        %s713 = scalar_select %p712, %s24, 1
        %s714 = smul.addr %s713, 8
        %s715 = scalar_lea.vmem %s12, %s714
      $region80: #{transformer_forward.11} parent=75 // pred_fallthru
        _
    $region76: #{transformer_forward.11} parent=5 // pred_fallthru
      _
  $region6: #{transformer_forward.11} parent=0 // loop_footer
    %s22 = sadd.s32 1, %s18
  $region7: #{transformer_forward.11} parent=0 // loop_footer_branch
    %17 = sbr.rel target = $region3
  $region8: #{transformer_forward.11} parent=0 // loop_exit
    _

// kernel: transformer_forward.8
$region0: #{transformer_forward.8}
  #allocation0 [shape = 'u32[]', space=smem, size = 0x4, offset = 0x4, fixed_abs, tag = 'smem constant byte address 0x4 - core index']
  #allocation1 [shape = 'u32[144,128]{1,0:T(1,128)}', space=vmem, size = 0x12000, scoped, tag = 'internal scratch']
  %s0 = inlined_call_operand.hbm [shape: f32[16,16], index: 0, kind: input, shape index: {}]
  %s1 = inlined_call_operand.vmem [shape: bf16[16,32], index: 1, kind: input, shape index: {}]
  %s2 = inlined_call_operand.vmem [shape: f32[1,32], index: 2, kind: input, shape index: {}]
  %s3 = inlined_call_operand.vmem [shape: f32[16,32], index: 3, kind: output, shape index: {}]
  %s4 = sld [smem:[#allocation0]]
  $region49: #{transformer_forward.8} parent=0
    _
  %s6 = ssub.s32 1, %s4
  %s7 = scalar_select 0, %s6, %s4
  $region1: #{transformer_forward.8} parent=0
    #allocation2 [shape = 'u8[8192]{0}', space=vmem, size = 0x2000, scoped, tag = 'input window, operand 0']
    #allocation3 [shape = 's32[2]{0}', space=sflag, size = 0x8, scoped, tag = 'scoped memory for transformer_forward.8']
    %8 = vsyncpa [#allocation3], 0
    %s9 = scalar_lea.sflag [#allocation3], 1
    %10 = vsyncpa %s9, 0
    loop: start=0, step=1, limit=4
    $region2: #{transformer_forward.8} parent=1 // loop_pre_header
      _
    $region3: #{transformer_forward.8} parent=1 // loop_header
      %s12 = sphi 0, %s16
      %p13 = scmp.ge.s32.totalorder %s12, 4
      %s22 = sphi 0, %s24
      %s25 = sphi 0, %s22
      %s26 = sphi 0, %s25
      %s42 = sphi 0, %s26
      %s46 = sphi 0, %s46
      %s48 = sphi 0, %s46
      %s49 = sphi 0, %s48
      %s63 = sphi 0, %s49
      %s67 = sphi 0, %s67
      %s69 = sphi 0, %s67
      %s70 = sphi 0, %s69
      %s84 = sphi 0, %s70
      %s90 = sphi 0, %s92
      %s93 = sphi 0, %s90
      %s94 = sphi 0, %s93
      %s110 = sphi 0, %s94
    $region4: #{transformer_forward.8} parent=1 // loop_header_branch
      %15 = sbr.rel (%p13) target = $region8
    $region5: #{transformer_forward.8} parent=1 // loop_body
      %s17 = ssub.s32 %s12, 1
      %s18 = ssub.s32 %s12, 2
      %s19 = sadd.s32 %s12, 1
      %s20 = ssub.s32 %s12, %s19
      %p21 = scmp.eq.s32.totalorder %s20, 0
      %s23 = sadd.s32 %s22, 1
      %s24 = scalar_select %p21, %s22, %s23
      %p27 = pneg %p21
      %p28 = scmp.eq.s32.totalorder %s12, 1
      %p29 = por %p27, %p28
      %p30 = scmp.ne.s32.totalorder %s22, %s25
      %p31 = scmp.eq.s32.totalorder %s12, 0
      %p32 = por %p30, %p31
      %p33 = scmp.ne.s32.totalorder %s22, %s25
      %p34 = scmp.eq.s32.totalorder %s17, 1
      %p35 = por %p33, %p34
      %p36 = scmp.ne.s32.totalorder %s25, %s26
      %p37 = scmp.eq.s32.totalorder %s17, 0
      %p38 = por %p36, %p37
      %p39 = scmp.ne.s32.totalorder %s25, %s26
      %p40 = scmp.eq.s32.totalorder %s18, 1
      %p41 = por %p39, %p40
      %p43 = scmp.ne.s32.totalorder %s26, %s42
      %p44 = scmp.eq.s32.totalorder %s18, 0
      %p45 = por %p43, %p44
      %s47 = sadd.s32 %s46, 1
      %p50 = scmp.eq.s32.totalorder %s12, 1
      %p51 = scmp.ne.s32.totalorder %s46, %s48
      %p52 = scmp.eq.s32.totalorder %s12, 0
      %p53 = por %p51, %p52
      %p54 = scmp.ne.s32.totalorder %s46, %s48
      %p55 = scmp.eq.s32.totalorder %s17, 1
      %p56 = por %p54, %p55
      %p57 = scmp.ne.s32.totalorder %s48, %s49
      %p58 = scmp.eq.s32.totalorder %s17, 0
      %p59 = por %p57, %p58
      %p60 = scmp.ne.s32.totalorder %s48, %s49
      %p61 = scmp.eq.s32.totalorder %s18, 1
      %p62 = por %p60, %p61
      %p64 = scmp.ne.s32.totalorder %s49, %s63
      %p65 = scmp.eq.s32.totalorder %s18, 0
      %p66 = por %p64, %p65
      %s68 = sadd.s32 %s67, 1
      %p71 = scmp.eq.s32.totalorder %s12, 1
      %p72 = scmp.ne.s32.totalorder %s67, %s69
      %p73 = scmp.eq.s32.totalorder %s12, 0
      %p74 = por %p72, %p73
      %p75 = scmp.ne.s32.totalorder %s67, %s69
      %p76 = scmp.eq.s32.totalorder %s17, 1
      %p77 = por %p75, %p76
      %p78 = scmp.ne.s32.totalorder %s69, %s70
      %p79 = scmp.eq.s32.totalorder %s17, 0
      %p80 = por %p78, %p79
      %p81 = scmp.ne.s32.totalorder %s69, %s70
      %p82 = scmp.eq.s32.totalorder %s18, 1
      %p83 = por %p81, %p82
      %p85 = scmp.ne.s32.totalorder %s70, %s84
      %p86 = scmp.eq.s32.totalorder %s18, 0
      %p87 = por %p85, %p86
      %s88 = ssub.s32 %s12, %s19
      %p89 = scmp.eq.s32.totalorder %s88, 0
      %s91 = sadd.s32 %s90, 1
      %s92 = scalar_select %p89, %s90, %s91
      %p95 = pneg %p89
      %p96 = scmp.eq.s32.totalorder %s12, 1
      %p97 = por %p95, %p96
      %p98 = scmp.ne.s32.totalorder %s90, %s93
      %p99 = scmp.eq.s32.totalorder %s12, 0
      %p100 = por %p98, %p99
      %p101 = scmp.ne.s32.totalorder %s90, %s93
      %p102 = scmp.eq.s32.totalorder %s17, 1
      %p103 = por %p101, %p102
      %p104 = scmp.ne.s32.totalorder %s93, %s94
      %p105 = scmp.eq.s32.totalorder %s17, 0
      %p106 = por %p104, %p105
      %p107 = scmp.ne.s32.totalorder %s93, %s94
      %p108 = scmp.eq.s32.totalorder %s18, 1
      %p109 = por %p107, %p108
      %p111 = scmp.ne.s32.totalorder %s94, %s110
      %p112 = scmp.eq.s32.totalorder %s18, 0
      %p113 = por %p111, %p112
      %p114 = scmp.le.s32.totalorder 1, %s12
      %p115 = scmp.lt.s32.totalorder %s12, 3
      %p116 = pnand %p114, %p115
      %p117 = pneg %p116
      // Predicated region
      $region9: #{transformer_forward.8} parent=5 // pred_check
        _
      $region10: #{transformer_forward.8} parent=5 // pred_check_branch
        %119 = sbr.rel (%p116) target = $region12
      $region11: #{transformer_forward.8} parent=5 // pred_region
        %s120 = ssub.s32 %s12, 1
        // Predicated region
        $region13: #{transformer_forward.8} parent=11 // pred_check
          %p121 = pneg %p59
        $region14: #{transformer_forward.8} parent=11 // pred_check_branch
          %123 = sbr.rel (%p121) target = $region16
        $region15: #{transformer_forward.8} parent=11 // pred_region
          _
        $region16: #{transformer_forward.8} parent=11 // pred_fallthru
          _
        // Predicated region
        $region17: #{transformer_forward.8} parent=11 // pred_check
          %p124 = pneg %p80
        $region18: #{transformer_forward.8} parent=11 // pred_check_branch
          %126 = sbr.rel (%p124) target = $region20
        $region19: #{transformer_forward.8} parent=11 // pred_region
          _
        $region20: #{transformer_forward.8} parent=11 // pred_fallthru
          _
      $region12: #{transformer_forward.8} parent=5 // pred_fallthru
        _
      %p127 = scmp.lt.s32.totalorder %s12, 2
      // Predicated region
      $region21: #{transformer_forward.8} parent=5 // pred_check
        %p128 = pneg %p127
      $region22: #{transformer_forward.8} parent=5 // pred_check_branch
        %130 = sbr.rel (%p128) target = $region24
      $region23: #{transformer_forward.8} parent=5 // pred_region
        // Predicated region
        $region25: #{transformer_forward.8} parent=23 // pred_check
          %p131 = pneg %p32
        $region26: #{transformer_forward.8} parent=23 // pred_check_branch
          %133 = sbr.rel (%p131) target = $region28
        $region27: #{transformer_forward.8} parent=23 // pred_region
          %s134 = sand.u32 %s22, 1
          %s135 = scalar_lea.sflag [#allocation3], %s134
          %s136 = sand.u32 %s22, 1
          %s137 = smul.addr %s136, 8
          %s138 = scalar_lea.vmem [#allocation2], %s137
          %s140 = ssub.s32 128, 128
          %141 = vsyncadd %s135, %s140
          %s142 = smul.addr %s12, 128
          %s143 = scalar_lea.hbm %s0, %s142
          %s145 = sshll.u32 %s138, 4
          %s146 = int_to_ptr.vmem [resolvable:$true] %s145
          %148 = dma.hbm_to_vmem [thread:$0]  %s143, 128, %s146, %s135
        $region28: #{transformer_forward.8} parent=23 // pred_fallthru
          _
      $region24: #{transformer_forward.8} parent=5 // pred_fallthru
        _
      %p149 = scmp.le.s32.totalorder 1, %s12
      %p150 = scmp.lt.s32.totalorder %s12, 3
      %p151 = pnand %p149, %p150
      %p152 = pneg %p151
      // Predicated region
      $region29: #{transformer_forward.8} parent=5 // pred_check
        _
      $region30: #{transformer_forward.8} parent=5 // pred_check_branch
        %154 = sbr.rel (%p151) target = $region32
      $region31: #{transformer_forward.8} parent=5 // pred_region
        %s155 = ssub.s32 %s12, 1
        %s156 = sand.u32 %s25, 1
        %s157 = scalar_lea.sflag [#allocation3], %s156
        %s158 = sand.u32 %s25, 1
        %s159 = smul.addr %s158, 8
        %s160 = scalar_lea.vmem [#allocation2], %s159
        // Predicated region
        $region33: #{transformer_forward.8} parent=31 // pred_check
          %p161 = pneg %p38
        $region34: #{transformer_forward.8} parent=31 // pred_check_branch
          %163 = sbr.rel (%p161) target = $region36
        $region35: #{transformer_forward.8} parent=31 // pred_region
          %164 = dma.done %s157, 128
        $region36: #{transformer_forward.8} parent=31 // pred_fallthru
          _
        %s165 = sand.u32 %s25, 1
        %s166 = scalar_lea.sflag [#allocation3], %s165
        %s167 = sand.u32 %s25, 1
        %s168 = smul.addr %s167, 8
        %s169 = scalar_lea.vmem [#allocation2], %s168
        %p170 = pneg %p38
        %p171 = pneg %p35
        %p172 = pneg %p59
        %p173 = pneg %p56
        %p174 = pneg %p80
        %p175 = pneg %p77
        %p176 = pneg %p106
        %p177 = pneg %p103
        %p178 = scmp.lt.s32.totalorder %s17, 1
        %s179 = scalar_select %p178, %s17, 1
        %s180 = smul.addr %s179, 8
        %s181 = scalar_lea.vmem %s3, %s180
        %p182 = scmp.lt.s32.totalorder %s17, 1
        %s183 = scalar_select %p182, %s17, 1
        %s184 = smul.addr %s183, 8
        %s185 = scalar_lea.vmem %s3, %s184
        %v187 = vld [vmem:[%s160] sm:$0xff]
        %v188 = vpack.c.bf16 %v187, %v187
        %v189 = vld [vmem:[%s1] sm:$0xf]
        %v190 = vld [vmem:[%s1 + $0x4] sm:$0xf]
        %v191 = vld [vmem:[%s2] sm:$0x1]
        %v193 = vlaneseq
        %v194 = vshrl.u32 %v193, 7
        %v195 = vsub.s32 0, %v194
        %v196 = vrot.slane %v191, %v195
        %v200 = vunpack.c.l.b16 %v189
        %v201 = vunpack.c.l.b16 %v190
        %v202 = vpack.c.b16 %v201, %v200
        %vm204 = vcmask 130048
        %v206 = vsel %vm204, %v188, 0
        %208 = vmatprep.subr.bf16.mxu0 0
        %209 = vmatpush1.bf16.msra.mxu0 0
        %210 = vmatprep.subr.bf16.mxu0 0
        %211 = vmatpush1.bf16.msra.mxu0 0
        %212 = vmatprep.subr.bf16.mxu0 0
        %213 = vmatpush1.bf16.msra.mxu0 0
        %214 = vmatprep.subr.bf16.mxu0 0
        %215 = vmatpush1.bf16.msra.mxu0 0
        %216 = vmatprep.subr.bf16.mxu0 0
        %217 = vmatpush1.bf16.msra.mxu0 0
        %218 = vmatprep.subr.bf16.mxu0 0
        %219 = vmatpush1.bf16.msra.mxu0 0
        %220 = vmatprep.subr.bf16.mxu0 0
        %221 = vmatpush1.bf16.msra.mxu0 0
        %222 = vmatprep.subr.bf16.mxu0 0
        %223 = vmatpush1.bf16.msra.mxu0 %v202
        %224 = vmatprep.subr.bf16.mxu0 0
        %225 = vmatpush2.bf16.msra.mxu0 0
        %226 = vmatprep.subr.bf16.mxu0 0
        %227 = vmatpush2.bf16.msra.mxu0 0
        %228 = vmatprep.subr.bf16.mxu0 0
        %229 = vmatpush2.bf16.msra.mxu0 0
        %230 = vmatprep.subr.bf16.mxu0 0
        %231 = vmatpush2.bf16.msra.mxu0 0
        %232 = vmatprep.subr.bf16.mxu0 0
        %233 = vmatpush2.bf16.msra.mxu0 0
        %234 = vmatprep.subr.bf16.mxu0 0
        %235 = vmatpush2.bf16.msra.mxu0 0
        %236 = vmatprep.subr.bf16.mxu0 0
        %237 = vmatpush2.bf16.msra.mxu0 0
        %238 = vmatprep.subr.bf16.mxu0 0
        %239 = vmatpush2.bf16.msra.mxu0 0
        %240 = vmatprep.mubr.bf16.mxu0 0
        %241 = vmatmul.mubr.bf16.gmra.mxu0 %v206
        %v242 = vpop.f32.mrf.mxu0
        %v243 = vadd.f32 %v196, %v242
        %v244 = vpop.f32.mrf.mxu0
        %v245 = vpop.f32.mrf.mxu0
        %v246 = vpop.f32.mrf.mxu0
        %247 = vdwg.mxu0
        %vm248 = vcmask 261120
        %249 = vst.msk [vmem:[%s185] sm:$0xff] %vm248, %v243
        %p250 = scmp.lt.s32.totalorder %s17, 1
        %s251 = scalar_select %p250, %s17, 1
        %s252 = smul.addr %s251, 8
        %s253 = scalar_lea.vmem %s3, %s252
        // Predicated region
        $region37: #{transformer_forward.8} parent=31 // pred_check
          %p254 = pneg %p103
        $region38: #{transformer_forward.8} parent=31 // pred_check_branch
          %256 = sbr.rel (%p254) target = $region40
        $region39: #{transformer_forward.8} parent=31 // pred_region
          _
        $region40: #{transformer_forward.8} parent=31 // pred_fallthru
          _
      $region32: #{transformer_forward.8} parent=5 // pred_fallthru
        _
      %p257 = scmp.le.s32.totalorder 2, %s12
      // Predicated region
      $region41: #{transformer_forward.8} parent=5 // pred_check
        %p258 = pneg %p257
      $region42: #{transformer_forward.8} parent=5 // pred_check_branch
        %260 = sbr.rel (%p258) target = $region44
      $region43: #{transformer_forward.8} parent=5 // pred_region
        %s261 = ssub.s32 %s12, 2
        // Predicated region
        $region45: #{transformer_forward.8} parent=43 // pred_check
          %p262 = pneg %p109
        $region46: #{transformer_forward.8} parent=43 // pred_check_branch
          %264 = sbr.rel (%p262) target = $region48
        $region47: #{transformer_forward.8} parent=43 // pred_region
          %p265 = scmp.lt.s32.totalorder %s18, 1
          %s266 = scalar_select %p265, %s18, 1
          %s267 = smul.addr %s266, 8
          %s268 = scalar_lea.vmem %s3, %s267
        $region48: #{transformer_forward.8} parent=43 // pred_fallthru
          _
      $region44: #{transformer_forward.8} parent=5 // pred_fallthru
        _
    $region6: #{transformer_forward.8} parent=1 // loop_footer
      %s16 = sadd.s32 1, %s12
    $region7: #{transformer_forward.8} parent=1 // loop_footer_branch
      %11 = sbr.rel target = $region3
    $region8: #{transformer_forward.8} parent=1 // loop_exit
      _
    %269 = vsyncpa [#allocation3], 1
    %s270 = scalar_lea.sflag [#allocation3], 1
    %271 = vsyncpa %s270, 1

// kernel: transformer_forward.15
$region0: #{transformer_forward.15}
  #allocation0 [shape = 'u32[]', space=smem, size = 0x4, offset = 0x4, fixed_abs, tag = 'smem constant byte address 0x4 - core index']
  #allocation1 [shape = 'u32[144,128]{1,0:T(1,128)}', space=vmem, size = 0x12000, scoped, tag = 'internal scratch']
  %s0 = inlined_call_operand.vmem [shape: f32[16,32], index: 0, kind: input, shape index: {}]
  %s1 = inlined_call_operand.vmem [shape: bf16[32,8], index: 1, kind: input, shape index: {}]
  %s2 = inlined_call_operand.vmem [shape: f32[1,8], index: 2, kind: input, shape index: {}]
  %s3 = inlined_call_operand.hbm [shape: f32[16,8], index: 3, kind: output, shape index: {}]
  %s4 = sld [smem:[#allocation0]]
  $region45: #{transformer_forward.15} parent=0
    _
  %s6 = ssub.s32 1, %s4
  %s7 = scalar_select 0, %s6, %s4
  $region1: #{transformer_forward.15} parent=0
    #allocation2 [shape = 'u8[8192]{0}', space=vmem, size = 0x2000, scoped, tag = 'output window, operand 0']
    #allocation3 [shape = 's32[2]{0}', space=sflag, size = 0x8, scoped, tag = 'scoped memory for transformer_forward.15']
    %8 = vsyncpa [#allocation3], 0
    %s9 = scalar_lea.sflag [#allocation3], 1
    %10 = vsyncpa %s9, 0
    loop: start=0, step=1, limit=4
    $region2: #{transformer_forward.15} parent=1 // loop_pre_header
      _
    $region3: #{transformer_forward.15} parent=1 // loop_header
      %s12 = sphi 0, %s16
      %p13 = scmp.ge.s32.totalorder %s12, 4
      %s22 = sphi 0, %s24
      %s25 = sphi 0, %s22
      %s26 = sphi 0, %s25
      %s42 = sphi 0, %s26
      %s46 = sphi 0, %s46
      %s48 = sphi 0, %s46
      %s49 = sphi 0, %s48
      %s63 = sphi 0, %s49
      %s67 = sphi 0, %s67
      %s69 = sphi 0, %s67
      %s70 = sphi 0, %s69
      %s84 = sphi 0, %s70
      %s90 = sphi 0, %s92
      %s93 = sphi 0, %s90
      %s94 = sphi 0, %s93
      %s110 = sphi 0, %s94
    $region4: #{transformer_forward.15} parent=1 // loop_header_branch
      %15 = sbr.rel (%p13) target = $region8
    $region5: #{transformer_forward.15} parent=1 // loop_body
      %s17 = ssub.s32 %s12, 1
      %s18 = ssub.s32 %s12, 2
      %s19 = sadd.s32 %s12, 1
      %s20 = ssub.s32 %s12, %s19
      %p21 = scmp.eq.s32.totalorder %s20, 0
      %s23 = sadd.s32 %s22, 1
      %s24 = scalar_select %p21, %s22, %s23
      %p27 = pneg %p21
      %p28 = scmp.eq.s32.totalorder %s12, 1
      %p29 = por %p27, %p28
      %p30 = scmp.ne.s32.totalorder %s22, %s25
      %p31 = scmp.eq.s32.totalorder %s12, 0
      %p32 = por %p30, %p31
      %p33 = scmp.ne.s32.totalorder %s22, %s25
      %p34 = scmp.eq.s32.totalorder %s17, 1
      %p35 = por %p33, %p34
      %p36 = scmp.ne.s32.totalorder %s25, %s26
      %p37 = scmp.eq.s32.totalorder %s17, 0
      %p38 = por %p36, %p37
      %p39 = scmp.ne.s32.totalorder %s25, %s26
      %p40 = scmp.eq.s32.totalorder %s18, 1
      %p41 = por %p39, %p40
      %p43 = scmp.ne.s32.totalorder %s26, %s42
      %p44 = scmp.eq.s32.totalorder %s18, 0
      %p45 = por %p43, %p44
      %s47 = sadd.s32 %s46, 1
      %p50 = scmp.eq.s32.totalorder %s12, 1
      %p51 = scmp.ne.s32.totalorder %s46, %s48
      %p52 = scmp.eq.s32.totalorder %s12, 0
      %p53 = por %p51, %p52
      %p54 = scmp.ne.s32.totalorder %s46, %s48
      %p55 = scmp.eq.s32.totalorder %s17, 1
      %p56 = por %p54, %p55
      %p57 = scmp.ne.s32.totalorder %s48, %s49
      %p58 = scmp.eq.s32.totalorder %s17, 0
      %p59 = por %p57, %p58
      %p60 = scmp.ne.s32.totalorder %s48, %s49
      %p61 = scmp.eq.s32.totalorder %s18, 1
      %p62 = por %p60, %p61
      %p64 = scmp.ne.s32.totalorder %s49, %s63
      %p65 = scmp.eq.s32.totalorder %s18, 0
      %p66 = por %p64, %p65
      %s68 = sadd.s32 %s67, 1
      %p71 = scmp.eq.s32.totalorder %s12, 1
      %p72 = scmp.ne.s32.totalorder %s67, %s69
      %p73 = scmp.eq.s32.totalorder %s12, 0
      %p74 = por %p72, %p73
      %p75 = scmp.ne.s32.totalorder %s67, %s69
      %p76 = scmp.eq.s32.totalorder %s17, 1
      %p77 = por %p75, %p76
      %p78 = scmp.ne.s32.totalorder %s69, %s70
      %p79 = scmp.eq.s32.totalorder %s17, 0
      %p80 = por %p78, %p79
      %p81 = scmp.ne.s32.totalorder %s69, %s70
      %p82 = scmp.eq.s32.totalorder %s18, 1
      %p83 = por %p81, %p82
      %p85 = scmp.ne.s32.totalorder %s70, %s84
      %p86 = scmp.eq.s32.totalorder %s18, 0
      %p87 = por %p85, %p86
      %s88 = ssub.s32 %s12, %s19
      %p89 = scmp.eq.s32.totalorder %s88, 0
      %s91 = sadd.s32 %s90, 1
      %s92 = scalar_select %p89, %s90, %s91
      %p95 = pneg %p89
      %p96 = scmp.eq.s32.totalorder %s12, 1
      %p97 = por %p95, %p96
      %p98 = scmp.ne.s32.totalorder %s90, %s93
      %p99 = scmp.eq.s32.totalorder %s12, 0
      %p100 = por %p98, %p99
      %p101 = scmp.ne.s32.totalorder %s90, %s93
      %p102 = scmp.eq.s32.totalorder %s17, 1
      %p103 = por %p101, %p102
      %p104 = scmp.ne.s32.totalorder %s93, %s94
      %p105 = scmp.eq.s32.totalorder %s17, 0
      %p106 = por %p104, %p105
      %p107 = scmp.ne.s32.totalorder %s93, %s94
      %p108 = scmp.eq.s32.totalorder %s18, 1
      %p109 = por %p107, %p108
      %p111 = scmp.ne.s32.totalorder %s94, %s110
      %p112 = scmp.eq.s32.totalorder %s18, 0
      %p113 = por %p111, %p112
      %p114 = scmp.le.s32.totalorder 1, %s12
      %p115 = scmp.lt.s32.totalorder %s12, 3
      %p116 = pnand %p114, %p115
      %p117 = pneg %p116
      // Predicated region
      $region9: #{transformer_forward.15} parent=5 // pred_check
        _
      $region10: #{transformer_forward.15} parent=5 // pred_check_branch
        %119 = sbr.rel (%p116) target = $region12
      $region11: #{transformer_forward.15} parent=5 // pred_region
        %s120 = ssub.s32 %s12, 1
        // Predicated region
        $region13: #{transformer_forward.15} parent=11 // pred_check
          %p121 = pneg %p59
        $region14: #{transformer_forward.15} parent=11 // pred_check_branch
          %123 = sbr.rel (%p121) target = $region16
        $region15: #{transformer_forward.15} parent=11 // pred_region
          _
        $region16: #{transformer_forward.15} parent=11 // pred_fallthru
          _
        // Predicated region
        $region17: #{transformer_forward.15} parent=11 // pred_check
          %p124 = pneg %p80
        $region18: #{transformer_forward.15} parent=11 // pred_check_branch
          %126 = sbr.rel (%p124) target = $region20
        $region19: #{transformer_forward.15} parent=11 // pred_region
          _
        $region20: #{transformer_forward.15} parent=11 // pred_fallthru
          _
      $region12: #{transformer_forward.15} parent=5 // pred_fallthru
        _
      %p127 = scmp.lt.s32.totalorder %s12, 2
      // Predicated region
      $region21: #{transformer_forward.15} parent=5 // pred_check
        %p128 = pneg %p127
      $region22: #{transformer_forward.15} parent=5 // pred_check_branch
        %130 = sbr.rel (%p128) target = $region24
      $region23: #{transformer_forward.15} parent=5 // pred_region
        // Predicated region
        $region25: #{transformer_forward.15} parent=23 // pred_check
          %p131 = pneg %p32
        $region26: #{transformer_forward.15} parent=23 // pred_check_branch
          %133 = sbr.rel (%p131) target = $region28
        $region27: #{transformer_forward.15} parent=23 // pred_region
          %p134 = scmp.lt.s32.totalorder %s12, 1
          %s135 = scalar_select %p134, %s12, 1
          %s136 = smul.addr %s135, 8
          %s137 = scalar_lea.vmem %s0, %s136
        $region28: #{transformer_forward.15} parent=23 // pred_fallthru
          _
      $region24: #{transformer_forward.15} parent=5 // pred_fallthru
        _
      %p138 = scmp.le.s32.totalorder 1, %s12
      %p139 = scmp.lt.s32.totalorder %s12, 3
      %p140 = pnand %p138, %p139
      %p141 = pneg %p140
      // Predicated region
      $region29: #{transformer_forward.15} parent=5 // pred_check
        _
      $region30: #{transformer_forward.15} parent=5 // pred_check_branch
        %143 = sbr.rel (%p140) target = $region32
      $region31: #{transformer_forward.15} parent=5 // pred_region
        %s144 = ssub.s32 %s12, 1
        %p145 = scmp.lt.s32.totalorder %s17, 1
        %s146 = scalar_select %p145, %s17, 1
        %s147 = smul.addr %s146, 8
        %s148 = scalar_lea.vmem %s0, %s147
        %p149 = pneg %p38
        %p150 = pneg %p35
        %p151 = pneg %p59
        %p152 = pneg %p56
        %p153 = pneg %p80
        %p154 = pneg %p77
        %p155 = pneg %p106
        %p156 = pneg %p103
        %s157 = sand.u32 %s93, 1
        %s158 = scalar_lea.sflag [#allocation3], %s157
        %s159 = sand.u32 %s93, 1
        %s160 = smul.addr %s159, 8
        %s161 = scalar_lea.vmem [#allocation2], %s160
        %p162 = scmp.lt.s32.totalorder %s17, 1
        %s163 = scalar_select %p162, %s17, 1
        %s164 = smul.addr %s163, 8
        %s165 = scalar_lea.vmem %s0, %s164
        %v167 = vld [vmem:[%s165] sm:$0xff]
        %v168 = vpack.c.bf16 %v167, %v167
        %v169 = vld [vmem:[%s1] sm:$0xf]
        %v170 = vld [vmem:[%s1 + $0x4] sm:$0xf]
        %v171 = vld [vmem:[%s1 + $0x8] sm:$0xf]
        %v172 = vld [vmem:[%s1 + $0xc] sm:$0xf]
        %v173 = vld [vmem:[%s2] sm:$0x1]
        %v175 = vlaneseq
        %v176 = vshrl.u32 %v175, 7
        %v177 = vsub.s32 0, %v176
        %v178 = vrot.slane %v173, %v177
        %v184 = vunpack.c.l.b16 %v169
        %v185 = vunpack.c.l.b16 %v170
        %v186 = vunpack.c.l.b16 %v171
        %v187 = vunpack.c.l.b16 %v172
        %v188 = vpack.c.b16 %v185, %v184
        %v189 = vpack.c.b16 %v187, %v186
        %vm192 = vcmask 261120
        %v194 = vsel %vm192, %v168, 0
        %196 = vmatprep.subr.bf16.mxu0 0
        %197 = vmatpush1.bf16.msra.mxu0 0
        %198 = vmatprep.subr.bf16.mxu0 0
        %199 = vmatpush1.bf16.msra.mxu0 0
        %200 = vmatprep.subr.bf16.mxu0 0
        %201 = vmatpush1.bf16.msra.mxu0 0
        %202 = vmatprep.subr.bf16.mxu0 0
        %203 = vmatpush1.bf16.msra.mxu0 0
        %204 = vmatprep.subr.bf16.mxu0 0
        %205 = vmatpush1.bf16.msra.mxu0 0
        %206 = vmatprep.subr.bf16.mxu0 0
        %207 = vmatpush1.bf16.msra.mxu0 0
        %208 = vmatprep.subr.bf16.mxu0 0
        %209 = vmatpush1.bf16.msra.mxu0 %v189
        %210 = vmatprep.subr.bf16.mxu0 0
        %211 = vmatpush1.bf16.msra.mxu0 %v188
        %212 = vmatprep.subr.bf16.mxu0 0
        %213 = vmatpush2.bf16.msra.mxu0 0
        %214 = vmatprep.subr.bf16.mxu0 0
        %215 = vmatpush2.bf16.msra.mxu0 0
        %216 = vmatprep.subr.bf16.mxu0 0
        %217 = vmatpush2.bf16.msra.mxu0 0
        %218 = vmatprep.subr.bf16.mxu0 0
        %219 = vmatpush2.bf16.msra.mxu0 0
        %220 = vmatprep.subr.bf16.mxu0 0
        %221 = vmatpush2.bf16.msra.mxu0 0
        %222 = vmatprep.subr.bf16.mxu0 0
        %223 = vmatpush2.bf16.msra.mxu0 0
        %224 = vmatprep.subr.bf16.mxu0 0
        %225 = vmatpush2.bf16.msra.mxu0 0
        %226 = vmatprep.subr.bf16.mxu0 0
        %227 = vmatpush2.bf16.msra.mxu0 0
        %228 = vmatprep.mubr.bf16.mxu0 0
        %229 = vmatmul.mubr.bf16.gmra.mxu0 %v194
        %v230 = vpop.f32.mrf.mxu0
        %v231 = vadd.f32 %v178, %v230
        %v232 = vpop.f32.mrf.mxu0
        %v233 = vpop.f32.mrf.mxu0
        %v234 = vpop.f32.mrf.mxu0
        %235 = vdwg.mxu0
        %vm236 = vcmask 64512
        %237 = vst.msk [vmem:[%s161] sm:$0xff] %vm236, %v231
        %s238 = sand.u32 %s93, 1
        %s239 = scalar_lea.sflag [#allocation3], %s238
        %s240 = sand.u32 %s93, 1
        %s241 = smul.addr %s240, 8
        %s242 = scalar_lea.vmem [#allocation2], %s241
        // Predicated region
        $region33: #{transformer_forward.15} parent=31 // pred_check
          %p243 = pneg %p103
        $region34: #{transformer_forward.15} parent=31 // pred_check_branch
          %245 = sbr.rel (%p243) target = $region36
        $region35: #{transformer_forward.15} parent=31 // pred_region
          %s247 = ssub.s32 128, 128
          %248 = vsyncadd %s239, %s247
          %s249 = smul.addr %s17, 128
          %s250 = scalar_lea.hbm %s3, %s249
          %s252 = sshll.u32 %s242, 4
          %s253 = int_to_ptr.vmem [resolvable:$true] %s252
          %255 = dma.vmem_to_hbm [thread:$0]  %s253, 128, %s250, %s239
        $region36: #{transformer_forward.15} parent=31 // pred_fallthru
          _
      $region32: #{transformer_forward.15} parent=5 // pred_fallthru
        _
      %p256 = scmp.le.s32.totalorder 2, %s12
      // Predicated region
      $region37: #{transformer_forward.15} parent=5 // pred_check
        %p257 = pneg %p256
      $region38: #{transformer_forward.15} parent=5 // pred_check_branch
        %259 = sbr.rel (%p257) target = $region40
      $region39: #{transformer_forward.15} parent=5 // pred_region
        %s260 = ssub.s32 %s12, 2
        // Predicated region
        $region41: #{transformer_forward.15} parent=39 // pred_check
          %p261 = pneg %p109
        $region42: #{transformer_forward.15} parent=39 // pred_check_branch
          %263 = sbr.rel (%p261) target = $region44
        $region43: #{transformer_forward.15} parent=39 // pred_region
          %s264 = sand.u32 %s94, 1
          %s265 = scalar_lea.sflag [#allocation3], %s264
          %s266 = sand.u32 %s94, 1
          %s267 = smul.addr %s266, 8
          %s268 = scalar_lea.vmem [#allocation2], %s267
          %269 = dma.done %s265, 128
        $region44: #{transformer_forward.15} parent=39 // pred_fallthru
          _
      $region40: #{transformer_forward.15} parent=5 // pred_fallthru
        _
    $region6: #{transformer_forward.15} parent=1 // loop_footer
      %s16 = sadd.s32 1, %s12
    $region7: #{transformer_forward.15} parent=1 // loop_footer_branch
      %11 = sbr.rel target = $region3
    $region8: #{transformer_forward.15} parent=1 // loop_exit
      _
    %270 = vsyncpa [#allocation3], 1
    %s271 = scalar_lea.sflag [#allocation3], 1
    %272 = vsyncpa %s271, 1

</llo_original>
